<compile_context>
chip_gen: v6e
topology: v6e:2x2x1
jax: 0.10.0
libtpu: 0.0.40
codegen_flags: <defaults>
</compile_context>

<pallas_src>
import functools

import jax
import jax.numpy as jnp
from jax.experimental import pallas as pl
from jax.experimental.pallas import tpu as pltpu

LANE = 128
_TAPS_S1 = tuple((ky, kx) for ky in range(3) for kx in range(3))


def _round_up(x, m):
    return (x + m - 1) // m * m


# ----------------------------- in-kernel helpers ------------------------------

def _conv3x3_bf16(xsrc, w_ref, taps, ho, wo):
    """3x3 conv as 3 MXU matmuls (one per ky) with K = 3*Cin_p.

    xsrc : (Hs, Ws, Cin_p) bf16 value (padded / phase-packed source window).
    w_ref: (3, 3*Cin_p, Cout_p) bf16 ref, inner layout (kx, cin).
    taps : 9 static (row0, col0) offsets in kernel order (ky major, kx minor).
    Returns an f32 accumulator of shape (ho*wo, Cout_p).
    """
    cin = xsrc.shape[-1]
    cout = w_ref.shape[-1]
    # Materialize only the distinct column-shifted slabs once (2 for the
    # stride-2 phase-packed layout, 3 for stride 1); every tap below is then a
    # cheap leading-axis (row) slice with a contiguous reshape.
    col_slabs = {c0: xsrc[:, c0:c0 + wo, :]
                 for c0 in sorted({c for _, c in taps})}
    acc = jnp.zeros((ho * wo, cout), jnp.float32)
    for ky in range(3):
        parts = []
        for kx in range(3):
            r0, c0 = taps[3 * ky + kx]
            parts.append(col_slabs[c0][r0:r0 + ho])
        slab = jnp.concatenate(parts, axis=-1).reshape(ho * wo, 3 * cin)
        acc = acc + jnp.dot(slab, w_ref[ky], preferred_element_type=jnp.float32)
    return acc


def _conv_bn(xsrc, w_ref, s_ref, b_ref, taps, ho, wo):
    acc = _conv3x3_bf16(xsrc, w_ref, taps, ho, wo)
    return acc * s_ref[...] + b_ref[...]


def _pad_hw(y):
    """Zero-pad a (ho, wo, c) value to (ho+2, wo+2, c) (conv2 halo, in VMEM)."""
    ho, wo, c = y.shape
    zr = jnp.zeros((1, wo, c), y.dtype)
    y = jnp.concatenate([zr, y, zr], axis=0)
    zc = jnp.zeros((ho + 2, 1, c), y.dtype)
    return jnp.concatenate([zc, y, zc], axis=1)


# -------------------------------- kernels -------------------------------------

def basic_block_identity_kernel(xph_ref, w1_ref, s1_ref, b1_ref,
                                w2_ref, s2_ref, b2_ref, o_ref,
                                *, taps1, ho, wo, sc_r0, sc_c0):
    """Fused block, identity shortcut (stride 1, in_planes == planes)."""
    x = xph_ref[0]                                     # (Hs, Ws, Cp) bf16
    cout_p = w1_ref.shape[-1]
    y1 = jnp.maximum(_conv_bn(x, w1_ref, s1_ref, b1_ref, taps1, ho, wo), 0.0)
    y1 = _pad_hw(y1.astype(jnp.bfloat16).reshape(ho, wo, cout_p))
    y2 = _conv_bn(y1, w2_ref, s2_ref, b2_ref, _TAPS_S1, ho, wo)
    res = x[sc_r0:sc_r0 + ho, sc_c0:sc_c0 + wo, :].reshape(ho * wo, cout_p)
    o_ref[0] = jnp.maximum(y2 + res.astype(jnp.float32), 0.0)


def basic_block_proj_kernel(xph_ref, w1_ref, s1_ref, b1_ref,
                            w2_ref, s2_ref, b2_ref,
                            wsc_ref, ssc_ref, bsc_ref, o_ref,
                            *, taps1, ho, wo, sc_r0, sc_c0):
    """Fused block, projection shortcut (1x1 conv + BN)."""
    x = xph_ref[0]                                     # (Hs, Ws, Cin_p) bf16
    cin_p = x.shape[-1]
    cout_p = w1_ref.shape[-1]
    y1 = jnp.maximum(_conv_bn(x, w1_ref, s1_ref, b1_ref, taps1, ho, wo), 0.0)
    y1 = _pad_hw(y1.astype(jnp.bfloat16).reshape(ho, wo, cout_p))
    y2 = _conv_bn(y1, w2_ref, s2_ref, b2_ref, _TAPS_S1, ho, wo)
    # Shortcut input is the strided view of x, already resident inside xph.
    xs = x[sc_r0:sc_r0 + ho, sc_c0:sc_c0 + wo, :].reshape(ho * wo, cin_p)
    sc = jnp.dot(xs, wsc_ref[...], preferred_element_type=jnp.float32)
    sc = sc * ssc_ref[...] + bsc_ref[...]
    o_ref[0] = jnp.maximum(y2 + sc, 0.0)


# ------------------------------ specs / params --------------------------------

def _img_spec(shape):
    """One image per grid step along the leading (batch) axis."""
    return pl.BlockSpec((1,) + tuple(shape[1:]), lambda b: (b, 0, 0, 0))


def _const_spec(shape):
    """Whole array, constant block index -> stays VMEM-resident across steps."""
    nd = len(shape)
    return pl.BlockSpec(tuple(shape), lambda b: (0,) * nd)


def _compiler_params():
    vmem = 48 * 1024 * 1024                 # safe default (fits v7x's 64 MiB)
    try:
        cap = int(pltpu.get_tpu_info().vmem_capacity_bytes)
        vmem = min(100 * 1024 * 1024, (cap * 3) // 4)   # ~96 MiB on v5e/v6e
    except Exception:
        pass
    return pltpu.CompilerParams(dimension_semantics=("parallel",),
                                vmem_limit_bytes=vmem)


# ------------------------------- JAX glue --------------------------------------

def _phase_pack(x, stride):
    """Pad spatially (padding=1); for stride 2 space-to-depth into 4 phases so
    every conv tap inside the kernel is a contiguous stride-1 window.

    Returns (xph, taps = 9 static (row0, col0) offsets, shortcut (row0, col0))."""
    n, h, w, c = x.shape
    xpad = jnp.pad(x, ((0, 0), (1, 1), (1, 1), (0, 0)))
    if stride == 1:
        return xpad, list(_TAPS_S1), (1, 1)
    assert stride == 2 and h % 2 == 0 and w % 2 == 0
    hq, wq = h // 2 + 1, w // 2 + 1
    phases = [xpad[:, a::2, b::2, :] for a in (0, 1) for b in (0, 1)]
    xph = jnp.concatenate(phases, axis=1)              # [N, 4*Hq, Wq, C]
    taps = [((2 * (ky % 2) + (kx % 2)) * hq + ky // 2, kx // 2)
            for ky in range(3) for kx in range(3)]
    # x[::2, ::2] == phase (1,1)[:ho, :wo]  -> shortcut source inside xph.
    return xph, taps, (3 * hq, 0)


def fold_bn(gamma, beta, mean, var, cout_p, eps=1e-5):
    scale = gamma / jnp.sqrt(var + eps)
    bias = beta - mean * scale
    scale = jnp.pad(scale, (0, cout_p - scale.shape[0]))
    bias = jnp.pad(bias, (0, cout_p - bias.shape[0]))
    return (scale.reshape(1, -1).astype(jnp.float32),
            bias.reshape(1, -1).astype(jnp.float32))


def _pack_conv3x3(w, cin_p, cout_p):
    """[3,3,cin,cout] -> zero-padded bf16 [3, 3*cin_p, cout_p] (inner = kx,cin)."""
    cin, cout = w.shape[2], w.shape[3]
    w = jnp.pad(w, ((0, 0), (0, 0), (0, cin_p - cin), (0, cout_p - cout)))
    return w.reshape(3, 3 * cin_p, cout_p).astype(jnp.bfloat16)


def init_params(key, in_planes, planes, stride):
    cin_p = _round_up(in_planes, LANE)
    cout_p = _round_up(planes, LANE)
    ks = jax.random.split(key, 6)

    def bn(k, c):
        k0, k1, k2, k3 = jax.random.split(k, 4)
        gamma = 1.0 + 0.1 * jax.random.normal(k0, (c,), jnp.float32)
        beta = 0.1 * jax.random.normal(k1, (c,), jnp.float32)
        mean = 0.1 * jax.random.normal(k2, (c,), jnp.float32)
        var = jnp.abs(jax.random.normal(k3, (c,), jnp.float32)) + 0.5
        return fold_bn(gamma, beta, mean, var, cout_p)

    w1 = 0.1 * jax.random.normal(ks[0], (3, 3, in_planes, planes), jnp.float32)
    w2 = 0.1 * jax.random.normal(ks[1], (3, 3, planes, planes), jnp.float32)
    params = {"w1": _pack_conv3x3(w1, cin_p, cout_p),
              "w2": _pack_conv3x3(w2, cout_p, cout_p)}
    params["bn1_scale"], params["bn1_bias"] = bn(ks[2], planes)
    params["bn2_scale"], params["bn2_bias"] = bn(ks[3], planes)

    if stride != 1 or in_planes != planes:
        wsc = 0.1 * jax.random.normal(ks[4], (in_planes, planes), jnp.float32)
        params["w_sc"] = jnp.pad(
            wsc, ((0, cin_p - in_planes), (0, cout_p - planes))).astype(jnp.bfloat16)
        params["bn_sc_scale"], params["bn_sc_bias"] = bn(ks[5], planes)
    return params


def basic_block_forward(x_nchw, params, in_planes, planes, stride):
    nb, _, h, w = x_nchw.shape
    cin_p = _round_up(in_planes, LANE)
    cout_p = _round_up(planes, LANE)

    # NCHW -> NHWC, zero-pad channels to a lane multiple, bf16 matmul operand.
    x = jnp.transpose(x_nchw, (0, 2, 3, 1)).astype(jnp.float32)
    x = jnp.pad(x, ((0, 0), (0, 0), (0, 0), (0, cin_p - in_planes)))
    x = x.astype(jnp.bfloat16)

    ho = (h - 1) // stride + 1
    wo = (w - 1) // stride + 1

    xph, taps1, (sc_r0, sc_c0) = _phase_pack(x, stride)

    out_shape = jax.ShapeDtypeStruct((nb, ho * wo, cout_p), jnp.float32)
    out_spec = pl.BlockSpec((1, ho * wo, cout_p), lambda b: (b, 0, 0))
    cparams = _compiler_params()

    if stride != 1 or in_planes != planes:
        kern = functools.partial(basic_block_proj_kernel, taps1=taps1,
                                 ho=ho, wo=wo, sc_r0=sc_r0, sc_c0=sc_c0)
        out = pl.pallas_call(
            kern, out_shape=out_shape, grid=(nb,),
            in_specs=[_img_spec(xph.shape),
                      _const_spec(params["w1"].shape),
                      _const_spec(params["bn1_scale"].shape),
                      _const_spec(params["bn1_bias"].shape),
                      _const_spec(params["w2"].shape),
                      _const_spec(params["bn2_scale"].shape),
                      _const_spec(params["bn2_bias"].shape),
                      _const_spec(params["w_sc"].shape),
                      _const_spec(params["bn_sc_scale"].shape),
                      _const_spec(params["bn_sc_bias"].shape)],
            out_specs=out_spec,
            compiler_params=cparams,
        )(xph, params["w1"], params["bn1_scale"], params["bn1_bias"],
          params["w2"], params["bn2_scale"], params["bn2_bias"],
          params["w_sc"], params["bn_sc_scale"], params["bn_sc_bias"])
    else:
        assert cin_p == cout_p, "identity shortcut requires in_planes == planes"
        kern = functools.partial(basic_block_identity_kernel, taps1=taps1,
                                 ho=ho, wo=wo, sc_r0=sc_r0, sc_c0=sc_c0)
        out = pl.pallas_call(
            kern, out_shape=out_shape, grid=(nb,),
            in_specs=[_img_spec(xph.shape),
                      _const_spec(params["w1"].shape),
                      _const_spec(params["bn1_scale"].shape),
                      _const_spec(params["bn1_bias"].shape),
                      _const_spec(params["w2"].shape),
                      _const_spec(params["bn2_scale"].shape),
                      _const_spec(params["bn2_bias"].shape)],
            out_specs=out_spec,
            compiler_params=cparams,
        )(xph, params["w1"], params["bn1_scale"], params["bn1_bias"],
          params["w2"], params["bn2_scale"], params["bn2_bias"])

    out = out.reshape(nb, ho, wo, cout_p)[:, :, :, :planes]
    return jnp.transpose(out, (0, 3, 1, 2))            # NHWC -> NCHW


# Pure-JAX reference (same packed bf16 params, f32 accumulation) for checking.
def reference_block(x_nchw, params, in_planes, planes, stride):
    cin_p = _round_up(in_planes, LANE)
    cout_p = _round_up(planes, LANE)
    x = jnp.transpose(x_nchw, (0, 2, 3, 1)).astype(jnp.float32)
    x = jnp.pad(x, ((0, 0), (0, 0), (0, 0), (0, cin_p - in_planes)))
    x = x.astype(jnp.bfloat16)

    def conv(v, wflat, cin, s):
        wgt = wflat.reshape(3, 3, cin, cout_p)
        return jax.lax.conv_general_dilated(
            v, wgt, (s, s), ((1, 1), (1, 1)),
            dimension_numbers=("NHWC", "HWIO", "NHWC"),
            preferred_element_type=jnp.float32)

    y = conv(x, params["w1"], cin_p, stride)
    y = jnp.maximum(y * params["bn1_scale"][0] + params["bn1_bias"][0], 0.0)
    y = conv(y.astype(jnp.bfloat16), params["w2"], cout_p, 1)
    y = y * params["bn2_scale"][0] + params["bn2_bias"][0]
    if stride != 1 or in_planes != planes:
        xs = x[:, ::stride, ::stride, :]
        sc = jnp.dot(xs, params["w_sc"], preferred_element_type=jnp.float32)
        sc = sc * params["bn_sc_scale"][0] + params["bn_sc_bias"][0]
    else:
        sc = x.astype(jnp.float32)
    out = jnp.maximum(y + sc, 0.0)[:, :, :, :planes]
    return jnp.transpose(out, (0, 3, 1, 2))


# --------------------------------- main ----------------------------------------

if __name__ == "__main__":
    key = jax.random.PRNGKey(0)
    kx1, kp1, kx2, kp2 = jax.random.split(key, 4)
    N, H, W = 2, 16, 16

    # Config A: downsample block (stride 2, channel expansion) -> projection shortcut.
    in_planes, planes, stride = 4, 8, 2
    x = jax.random.normal(kx1, (N, in_planes, H, W), jnp.float32)       # NCHW
    params = init_params(kp1, in_planes, planes, stride)
    fwd = jax.jit(functools.partial(basic_block_forward, in_planes=in_planes,
                                    planes=planes, stride=stride))
    out = jax.block_until_ready(fwd(x, params))
    assert out.shape == (N, planes, H // stride, W // stride), out.shape
    assert bool(jnp.all(jnp.isfinite(out)))
    ref = reference_block(x, params, in_planes, planes, stride)
    assert bool(jnp.allclose(out, ref, atol=1e-2, rtol=1e-2)), \
        float(jnp.max(jnp.abs(out - ref)))

    # Config B: identity-shortcut block (stride 1, same planes).
    in_planes2, planes2, stride2 = 8, 8, 1
    x2 = jax.random.normal(kx2, (N, in_planes2, H, W), jnp.float32)
    params2 = init_params(kp2, in_planes2, planes2, stride2)
    fwd2 = jax.jit(functools.partial(basic_block_forward, in_planes=in_planes2,
                                     planes=planes2, stride=stride2))
    out2 = jax.block_until_ready(fwd2(x2, params2))
    assert out2.shape == (N, planes2, H, W), out2.shape
    assert bool(jnp.all(jnp.isfinite(out2)))
    ref2 = reference_block(x2, params2, in_planes2, planes2, stride2)
    assert bool(jnp.allclose(out2, ref2, atol=1e-2, rtol=1e-2)), \
        float(jnp.max(jnp.abs(out2 - ref2)))

    print("KERNEL_OK")
</pallas_src>

<mosaic_0001>
module attributes {stable_mosaic.version = 11 : i64} {
  func.func @basic_block_proj_kernel(%arg0: i32, %arg1: memref<1x36x9x128xbf16, #tpu.memory_space<vmem>>, %arg2: memref<3x384x128xbf16, #tpu.memory_space<vmem>>, %arg3: memref<1x128xf32, #tpu.memory_space<vmem>>, %arg4: memref<1x128xf32, #tpu.memory_space<vmem>>, %arg5: memref<3x384x128xbf16, #tpu.memory_space<vmem>>, %arg6: memref<1x128xf32, #tpu.memory_space<vmem>>, %arg7: memref<1x128xf32, #tpu.memory_space<vmem>>, %arg8: memref<128x128xbf16, #tpu.memory_space<vmem>>, %arg9: memref<1x128xf32, #tpu.memory_space<vmem>>, %arg10: memref<1x128xf32, #tpu.memory_space<vmem>>, %arg11: memref<1x64x128xf32, #tpu.memory_space<vmem>>) attributes {dimension_semantics = [#tpu.dimension_semantics<parallel>], iteration_bounds = array<i64: 2>, scalar_prefetch = 0 : i64, scratch_operands = 0 : i64, tpu.core_type = #tpu.core_type<tc>, window_params = [{transform_indices = @transform_0, window_bounds = array<i64: 1, 36, 9, 128>}, {pipeline_mode = #tpu.pipeline_mode<synchronous>, transform_indices = @transform_1, window_bounds = array<i64: 3, 384, 128>}, {pipeline_mode = #tpu.pipeline_mode<synchronous>, transform_indices = @transform_2, window_bounds = array<i64: 1, 128>}, {pipeline_mode = #tpu.pipeline_mode<synchronous>, transform_indices = @transform_3, window_bounds = array<i64: 1, 128>}, {pipeline_mode = #tpu.pipeline_mode<synchronous>, transform_indices = @transform_4, window_bounds = array<i64: 3, 384, 128>}, {pipeline_mode = #tpu.pipeline_mode<synchronous>, transform_indices = @transform_5, window_bounds = array<i64: 1, 128>}, {pipeline_mode = #tpu.pipeline_mode<synchronous>, transform_indices = @transform_6, window_bounds = array<i64: 1, 128>}, {pipeline_mode = #tpu.pipeline_mode<synchronous>, transform_indices = @transform_7, window_bounds = array<i64: 128, 128>}, {pipeline_mode = #tpu.pipeline_mode<synchronous>, transform_indices = @transform_8, window_bounds = array<i64: 1, 128>}, {pipeline_mode = #tpu.pipeline_mode<synchronous>, transform_indices = @transform_9, window_bounds = array<i64: 1, 128>}, {transform_indices = @transform_10, window_bounds = array<i64: 1, 64, 128>}]} {
    %c0 = arith.constant 0 : index
    %c0_0 = arith.constant 0 : index
    %c0_1 = arith.constant 0 : index
    %c0_2 = arith.constant 0 : index
    %0 = vector.load %arg1[%c0, %c0_0, %c0_1, %c0_2] : memref<1x36x9x128xbf16, #tpu.memory_space<vmem>>, vector<1x36x9x128xbf16>
    %1 = vector.shape_cast %0 : vector<1x36x9x128xbf16> to vector<36x9x128xbf16>
    %2 = vector.extract_strided_slice %1 {offsets = [0, 0, 0], sizes = [36, 8, 128], strides = [1, 1, 1]} : vector<36x9x128xbf16> to vector<36x8x128xbf16>
    %3 = vector.extract_strided_slice %1 {offsets = [0, 1, 0], sizes = [36, 8, 128], strides = [1, 1, 1]} : vector<36x9x128xbf16> to vector<36x8x128xbf16>
    %cst = arith.constant 0.000000e+00 : f32
    %4 = vector.broadcast %cst : f32 to vector<64x128xf32>
    %5 = vector.extract_strided_slice %2 {offsets = [0, 0, 0], sizes = [8, 8, 128], strides = [1, 1, 1]} : vector<36x8x128xbf16> to vector<8x8x128xbf16>
    %6 = vector.extract_strided_slice %2 {offsets = [9, 0, 0], sizes = [8, 8, 128], strides = [1, 1, 1]} : vector<36x8x128xbf16> to vector<8x8x128xbf16>
    %7 = vector.extract_strided_slice %3 {offsets = [0, 0, 0], sizes = [8, 8, 128], strides = [1, 1, 1]} : vector<36x8x128xbf16> to vector<8x8x128xbf16>
    %8 = tpu.concatenate %5, %6, %7 in 2 : vector<8x8x128xbf16>, vector<8x8x128xbf16>, vector<8x8x128xbf16> -> vector<8x8x384xbf16>
    %9 = vector.shape_cast %8 : vector<8x8x384xbf16> to vector<64x384xbf16>
    %c0_3 = arith.constant 0 : index
    %c0_4 = arith.constant 0 : index
    %c0_5 = arith.constant 0 : index
    %10 = vector.load %arg2[%c0_3, %c0_4, %c0_5] : memref<3x384x128xbf16, #tpu.memory_space<vmem>>, vector<1x384x128xbf16>
    %11 = vector.shape_cast %10 : vector<1x384x128xbf16> to vector<384x128xbf16>
    %cst_6 = arith.constant dense<0.000000e+00> : vector<64x128xf32>
    %12 = tpu.matmul %9, %11, %cst_6 {dimension_numbers = #tpu.dot_dimension_numbers<[1], [0], [0], [1], [0, 0, 1, 1], [], []>} : vector<64x384xbf16>, vector<384x128xbf16>, vector<64x128xf32> -> vector<64x128xf32>
    %13 = arith.addf %4, %12 : vector<64x128xf32>
    %14 = vector.extract_strided_slice %2 {offsets = [18, 0, 0], sizes = [8, 8, 128], strides = [1, 1, 1]} : vector<36x8x128xbf16> to vector<8x8x128xbf16>
    %15 = vector.extract_strided_slice %2 {offsets = [27, 0, 0], sizes = [8, 8, 128], strides = [1, 1, 1]} : vector<36x8x128xbf16> to vector<8x8x128xbf16>
    %16 = vector.extract_strided_slice %3 {offsets = [18, 0, 0], sizes = [8, 8, 128], strides = [1, 1, 1]} : vector<36x8x128xbf16> to vector<8x8x128xbf16>
    %17 = tpu.concatenate %14, %15, %16 in 2 : vector<8x8x128xbf16>, vector<8x8x128xbf16>, vector<8x8x128xbf16> -> vector<8x8x384xbf16>
    %18 = vector.shape_cast %17 : vector<8x8x384xbf16> to vector<64x384xbf16>
    %c1 = arith.constant 1 : index
    %c0_7 = arith.constant 0 : index
    %c0_8 = arith.constant 0 : index
    %19 = vector.load %arg2[%c1, %c0_7, %c0_8] : memref<3x384x128xbf16, #tpu.memory_space<vmem>>, vector<1x384x128xbf16>
    %20 = vector.shape_cast %19 : vector<1x384x128xbf16> to vector<384x128xbf16>
    %cst_9 = arith.constant dense<0.000000e+00> : vector<64x128xf32>
    %21 = tpu.matmul %18, %20, %cst_9 {dimension_numbers = #tpu.dot_dimension_numbers<[1], [0], [0], [1], [0, 0, 1, 1], [], []>} : vector<64x384xbf16>, vector<384x128xbf16>, vector<64x128xf32> -> vector<64x128xf32>
    %22 = arith.addf %13, %21 : vector<64x128xf32>
    %23 = vector.extract_strided_slice %2 {offsets = [1, 0, 0], sizes = [8, 8, 128], strides = [1, 1, 1]} : vector<36x8x128xbf16> to vector<8x8x128xbf16>
    %24 = vector.extract_strided_slice %2 {offsets = [10, 0, 0], sizes = [8, 8, 128], strides = [1, 1, 1]} : vector<36x8x128xbf16> to vector<8x8x128xbf16>
    %25 = vector.extract_strided_slice %3 {offsets = [1, 0, 0], sizes = [8, 8, 128], strides = [1, 1, 1]} : vector<36x8x128xbf16> to vector<8x8x128xbf16>
    %26 = tpu.concatenate %23, %24, %25 in 2 : vector<8x8x128xbf16>, vector<8x8x128xbf16>, vector<8x8x128xbf16> -> vector<8x8x384xbf16>
    %27 = vector.shape_cast %26 : vector<8x8x384xbf16> to vector<64x384xbf16>
    %c2 = arith.constant 2 : index
    %c0_10 = arith.constant 0 : index
    %c0_11 = arith.constant 0 : index
    %28 = vector.load %arg2[%c2, %c0_10, %c0_11] : memref<3x384x128xbf16, #tpu.memory_space<vmem>>, vector<1x384x128xbf16>
    %29 = vector.shape_cast %28 : vector<1x384x128xbf16> to vector<384x128xbf16>
    %cst_12 = arith.constant dense<0.000000e+00> : vector<64x128xf32>
    %30 = tpu.matmul %27, %29, %cst_12 {dimension_numbers = #tpu.dot_dimension_numbers<[1], [0], [0], [1], [0, 0, 1, 1], [], []>} : vector<64x384xbf16>, vector<384x128xbf16>, vector<64x128xf32> -> vector<64x128xf32>
    %31 = arith.addf %22, %30 : vector<64x128xf32>
    %c0_13 = arith.constant 0 : index
    %c0_14 = arith.constant 0 : index
    %32 = vector.load %arg3[%c0_13, %c0_14] : memref<1x128xf32, #tpu.memory_space<vmem>>, vector<1x128xf32>
    %33 = vector.broadcast %32 : vector<1x128xf32> to vector<64x128xf32>
    %34 = arith.mulf %31, %33 : vector<64x128xf32>
    %c0_15 = arith.constant 0 : index
    %c0_16 = arith.constant 0 : index
    %35 = vector.load %arg4[%c0_15, %c0_16] : memref<1x128xf32, #tpu.memory_space<vmem>>, vector<1x128xf32>
    %36 = vector.broadcast %35 : vector<1x128xf32> to vector<64x128xf32>
    %37 = arith.addf %34, %36 : vector<64x128xf32>
    %cst_17 = arith.constant 0.000000e+00 : f32
    %38 = vector.broadcast %cst_17 : f32 to vector<64x128xf32>
    %39 = arith.maximumf %37, %38 : vector<64x128xf32>
    %40 = arith.truncf %39 : vector<64x128xf32> to vector<64x128xbf16>
    %41 = vector.shape_cast %40 : vector<64x128xbf16> to vector<8x8x128xbf16>
    %cst_18 = arith.constant 0.000000e+00 : bf16
    %42 = vector.broadcast %cst_18 : bf16 to vector<1x8x128xbf16>
    %43 = tpu.concatenate %42, %41, %42 in 0 : vector<1x8x128xbf16>, vector<8x8x128xbf16>, vector<1x8x128xbf16> -> vector<10x8x128xbf16>
    %cst_19 = arith.constant 0.000000e+00 : bf16
    %44 = vector.broadcast %cst_19 : bf16 to vector<10x1x128xbf16>
    %45 = tpu.concatenate %44, %43, %44 in 1 : vector<10x1x128xbf16>, vector<10x8x128xbf16>, vector<10x1x128xbf16> -> vector<10x10x128xbf16>
    %46 = vector.extract_strided_slice %45 {offsets = [0, 0, 0], sizes = [10, 8, 128], strides = [1, 1, 1]} : vector<10x10x128xbf16> to vector<10x8x128xbf16>
    %47 = vector.extract_strided_slice %45 {offsets = [0, 1, 0], sizes = [10, 8, 128], strides = [1, 1, 1]} : vector<10x10x128xbf16> to vector<10x8x128xbf16>
    %48 = vector.extract_strided_slice %45 {offsets = [0, 2, 0], sizes = [10, 8, 128], strides = [1, 1, 1]} : vector<10x10x128xbf16> to vector<10x8x128xbf16>
    %cst_20 = arith.constant 0.000000e+00 : f32
    %49 = vector.broadcast %cst_20 : f32 to vector<64x128xf32>
    %50 = vector.extract_strided_slice %46 {offsets = [0, 0, 0], sizes = [8, 8, 128], strides = [1, 1, 1]} : vector<10x8x128xbf16> to vector<8x8x128xbf16>
    %51 = vector.extract_strided_slice %47 {offsets = [0, 0, 0], sizes = [8, 8, 128], strides = [1, 1, 1]} : vector<10x8x128xbf16> to vector<8x8x128xbf16>
    %52 = vector.extract_strided_slice %48 {offsets = [0, 0, 0], sizes = [8, 8, 128], strides = [1, 1, 1]} : vector<10x8x128xbf16> to vector<8x8x128xbf16>
    %53 = tpu.concatenate %50, %51, %52 in 2 : vector<8x8x128xbf16>, vector<8x8x128xbf16>, vector<8x8x128xbf16> -> vector<8x8x384xbf16>
    %54 = vector.shape_cast %53 : vector<8x8x384xbf16> to vector<64x384xbf16>
    %c0_21 = arith.constant 0 : index
    %c0_22 = arith.constant 0 : index
    %c0_23 = arith.constant 0 : index
    %55 = vector.load %arg5[%c0_21, %c0_22, %c0_23] : memref<3x384x128xbf16, #tpu.memory_space<vmem>>, vector<1x384x128xbf16>
    %56 = vector.shape_cast %55 : vector<1x384x128xbf16> to vector<384x128xbf16>
    %cst_24 = arith.constant dense<0.000000e+00> : vector<64x128xf32>
    %57 = tpu.matmul %54, %56, %cst_24 {dimension_numbers = #tpu.dot_dimension_numbers<[1], [0], [0], [1], [0, 0, 1, 1], [], []>} : vector<64x384xbf16>, vector<384x128xbf16>, vector<64x128xf32> -> vector<64x128xf32>
    %58 = arith.addf %49, %57 : vector<64x128xf32>
    %59 = vector.extract_strided_slice %46 {offsets = [1, 0, 0], sizes = [8, 8, 128], strides = [1, 1, 1]} : vector<10x8x128xbf16> to vector<8x8x128xbf16>
    %60 = vector.extract_strided_slice %47 {offsets = [1, 0, 0], sizes = [8, 8, 128], strides = [1, 1, 1]} : vector<10x8x128xbf16> to vector<8x8x128xbf16>
    %61 = vector.extract_strided_slice %48 {offsets = [1, 0, 0], sizes = [8, 8, 128], strides = [1, 1, 1]} : vector<10x8x128xbf16> to vector<8x8x128xbf16>
    %62 = tpu.concatenate %59, %60, %61 in 2 : vector<8x8x128xbf16>, vector<8x8x128xbf16>, vector<8x8x128xbf16> -> vector<8x8x384xbf16>
    %63 = vector.shape_cast %62 : vector<8x8x384xbf16> to vector<64x384xbf16>
    %c1_25 = arith.constant 1 : index
    %c0_26 = arith.constant 0 : index
    %c0_27 = arith.constant 0 : index
    %64 = vector.load %arg5[%c1_25, %c0_26, %c0_27] : memref<3x384x128xbf16, #tpu.memory_space<vmem>>, vector<1x384x128xbf16>
    %65 = vector.shape_cast %64 : vector<1x384x128xbf16> to vector<384x128xbf16>
    %cst_28 = arith.constant dense<0.000000e+00> : vector<64x128xf32>
    %66 = tpu.matmul %63, %65, %cst_28 {dimension_numbers = #tpu.dot_dimension_numbers<[1], [0], [0], [1], [0, 0, 1, 1], [], []>} : vector<64x384xbf16>, vector<384x128xbf16>, vector<64x128xf32> -> vector<64x128xf32>
    %67 = arith.addf %58, %66 : vector<64x128xf32>
    %68 = vector.extract_strided_slice %46 {offsets = [2, 0, 0], sizes = [8, 8, 128], strides = [1, 1, 1]} : vector<10x8x128xbf16> to vector<8x8x128xbf16>
    %69 = vector.extract_strided_slice %47 {offsets = [2, 0, 0], sizes = [8, 8, 128], strides = [1, 1, 1]} : vector<10x8x128xbf16> to vector<8x8x128xbf16>
    %70 = vector.extract_strided_slice %48 {offsets = [2, 0, 0], sizes = [8, 8, 128], strides = [1, 1, 1]} : vector<10x8x128xbf16> to vector<8x8x128xbf16>
    %71 = tpu.concatenate %68, %69, %70 in 2 : vector<8x8x128xbf16>, vector<8x8x128xbf16>, vector<8x8x128xbf16> -> vector<8x8x384xbf16>
    %72 = vector.shape_cast %71 : vector<8x8x384xbf16> to vector<64x384xbf16>
    %c2_29 = arith.constant 2 : index
    %c0_30 = arith.constant 0 : index
    %c0_31 = arith.constant 0 : index
    %73 = vector.load %arg5[%c2_29, %c0_30, %c0_31] : memref<3x384x128xbf16, #tpu.memory_space<vmem>>, vector<1x384x128xbf16>
    %74 = vector.shape_cast %73 : vector<1x384x128xbf16> to vector<384x128xbf16>
    %cst_32 = arith.constant dense<0.000000e+00> : vector<64x128xf32>
    %75 = tpu.matmul %72, %74, %cst_32 {dimension_numbers = #tpu.dot_dimension_numbers<[1], [0], [0], [1], [0, 0, 1, 1], [], []>} : vector<64x384xbf16>, vector<384x128xbf16>, vector<64x128xf32> -> vector<64x128xf32>
    %76 = arith.addf %67, %75 : vector<64x128xf32>
    %c0_33 = arith.constant 0 : index
    %c0_34 = arith.constant 0 : index
    %77 = vector.load %arg6[%c0_33, %c0_34] : memref<1x128xf32, #tpu.memory_space<vmem>>, vector<1x128xf32>
    %78 = vector.broadcast %77 : vector<1x128xf32> to vector<64x128xf32>
    %79 = arith.mulf %76, %78 : vector<64x128xf32>
    %c0_35 = arith.constant 0 : index
    %c0_36 = arith.constant 0 : index
    %80 = vector.load %arg7[%c0_35, %c0_36] : memref<1x128xf32, #tpu.memory_space<vmem>>, vector<1x128xf32>
    %81 = vector.broadcast %80 : vector<1x128xf32> to vector<64x128xf32>
    %82 = arith.addf %79, %81 : vector<64x128xf32>
    %83 = vector.extract_strided_slice %1 {offsets = [27, 0, 0], sizes = [8, 8, 128], strides = [1, 1, 1]} : vector<36x9x128xbf16> to vector<8x8x128xbf16>
    %84 = vector.shape_cast %83 : vector<8x8x128xbf16> to vector<64x128xbf16>
    %c0_37 = arith.constant 0 : index
    %c0_38 = arith.constant 0 : index
    %85 = vector.load %arg8[%c0_37, %c0_38] : memref<128x128xbf16, #tpu.memory_space<vmem>>, vector<128x128xbf16>
    %cst_39 = arith.constant dense<0.000000e+00> : vector<64x128xf32>
    %86 = tpu.matmul %84, %85, %cst_39 {dimension_numbers = #tpu.dot_dimension_numbers<[1], [0], [0], [1], [0, 0, 1, 1], [], []>} : vector<64x128xbf16>, vector<128x128xbf16>, vector<64x128xf32> -> vector<64x128xf32>
    %c0_40 = arith.constant 0 : index
    %c0_41 = arith.constant 0 : index
    %87 = vector.load %arg9[%c0_40, %c0_41] : memref<1x128xf32, #tpu.memory_space<vmem>>, vector<1x128xf32>
    %88 = vector.broadcast %87 : vector<1x128xf32> to vector<64x128xf32>
    %89 = arith.mulf %86, %88 : vector<64x128xf32>
    %c0_42 = arith.constant 0 : index
    %c0_43 = arith.constant 0 : index
    %90 = vector.load %arg10[%c0_42, %c0_43] : memref<1x128xf32, #tpu.memory_space<vmem>>, vector<1x128xf32>
    %91 = vector.broadcast %90 : vector<1x128xf32> to vector<64x128xf32>
    %92 = arith.addf %89, %91 : vector<64x128xf32>
    %93 = arith.addf %82, %92 : vector<64x128xf32>
    %cst_44 = arith.constant 0.000000e+00 : f32
    %94 = vector.broadcast %cst_44 : f32 to vector<64x128xf32>
    %95 = arith.maximumf %93, %94 : vector<64x128xf32>
    %c0_45 = arith.constant 0 : index
    %c0_46 = arith.constant 0 : index
    %c0_47 = arith.constant 0 : index
    %96 = vector.load %arg11[%c0_45, %c0_46, %c0_47] : memref<1x64x128xf32, #tpu.memory_space<vmem>>, vector<1x64x128xf32>
    %97 = vector.shape_cast %96 : vector<1x64x128xf32> to vector<64x128xf32>
    %98 = vector.shape_cast %95 : vector<64x128xf32> to vector<1x64x128xf32>
    tpu.vector_store %arg11[%c0_45, %c0_46, %c0_47], %98 {strides = array<i32>} : memref<1x64x128xf32, #tpu.memory_space<vmem>>, vector<1x64x128xf32>,
    return
  }
  func.func @transform_0(%arg0: i32) -> (i32, i32, i32, i32) {
    %c0_i32 = arith.constant 0 : i32
    %c0_i32_0 = arith.constant 0 : i32
    %c0_i32_1 = arith.constant 0 : i32
    %c0_i32_2 = arith.constant 0 : i32
    return %arg0, %c0_i32, %c0_i32_0, %c0_i32_1 : i32, i32, i32, i32
  }
  func.func @transform_1(%arg0: i32) -> (i32, i32, i32) {
    %c0_i32 = arith.constant 0 : i32
    %c0_i32_0 = arith.constant 0 : i32
    %c0_i32_1 = arith.constant 0 : i32
    %c0_i32_2 = arith.constant 0 : i32
    return %c0_i32, %c0_i32_0, %c0_i32_1 : i32, i32, i32
  }
  func.func @transform_2(%arg0: i32) -> (i32, i32) {
    %c0_i32 = arith.constant 0 : i32
    %c0_i32_0 = arith.constant 0 : i32
    %c0_i32_1 = arith.constant 0 : i32
    return %c0_i32, %c0_i32_0 : i32, i32
  }
  func.func @transform_3(%arg0: i32) -> (i32, i32) {
    %c0_i32 = arith.constant 0 : i32
    %c0_i32_0 = arith.constant 0 : i32
    %c0_i32_1 = arith.constant 0 : i32
    return %c0_i32, %c0_i32_0 : i32, i32
  }
  func.func @transform_4(%arg0: i32) -> (i32, i32, i32) {
    %c0_i32 = arith.constant 0 : i32
    %c0_i32_0 = arith.constant 0 : i32
    %c0_i32_1 = arith.constant 0 : i32
    %c0_i32_2 = arith.constant 0 : i32
    return %c0_i32, %c0_i32_0, %c0_i32_1 : i32, i32, i32
  }
  func.func @transform_5(%arg0: i32) -> (i32, i32) {
    %c0_i32 = arith.constant 0 : i32
    %c0_i32_0 = arith.constant 0 : i32
    %c0_i32_1 = arith.constant 0 : i32
    return %c0_i32, %c0_i32_0 : i32, i32
  }
  func.func @transform_6(%arg0: i32) -> (i32, i32) {
    %c0_i32 = arith.constant 0 : i32
    %c0_i32_0 = arith.constant 0 : i32
    %c0_i32_1 = arith.constant 0 : i32
    return %c0_i32, %c0_i32_0 : i32, i32
  }
  func.func @transform_7(%arg0: i32) -> (i32, i32) {
    %c0_i32 = arith.constant 0 : i32
    %c0_i32_0 = arith.constant 0 : i32
    %c0_i32_1 = arith.constant 0 : i32
    return %c0_i32, %c0_i32_0 : i32, i32
  }
  func.func @transform_8(%arg0: i32) -> (i32, i32) {
    %c0_i32 = arith.constant 0 : i32
    %c0_i32_0 = arith.constant 0 : i32
    %c0_i32_1 = arith.constant 0 : i32
    return %c0_i32, %c0_i32_0 : i32, i32
  }
  func.func @transform_9(%arg0: i32) -> (i32, i32) {
    %c0_i32 = arith.constant 0 : i32
    %c0_i32_0 = arith.constant 0 : i32
    %c0_i32_1 = arith.constant 0 : i32
    return %c0_i32, %c0_i32_0 : i32, i32
  }
  func.func @transform_10(%arg0: i32) -> (i32, i32, i32) {
    %c0_i32 = arith.constant 0 : i32
    %c0_i32_0 = arith.constant 0 : i32
    %c0_i32_1 = arith.constant 0 : i32
    return %arg0, %c0_i32, %c0_i32_0 : i32, i32, i32
  }
}

</mosaic_0001>

<llo_original>
// kernel: basic_block_forward.1
$region0: #{basic_block_forward.1}
  #allocation0 [shape = 'u32[]', space=smem, size = 0x4, offset = 0x4, fixed_abs, tag = 'smem constant byte address 0x4 - core index']
  #allocation1 [shape = 'u32[144,128]{1,0:T(1,128)}', space=vmem, size = 0x12000, scoped, tag = 'internal scratch']
  %s0 = inlined_call_operand.vmem [shape: bf16[2,36,9,128], index: 0, kind: input, shape index: {}]
  %s1 = inlined_call_operand.vmem [shape: bf16[3,384,128], index: 1, kind: input, shape index: {}]
  %s2 = inlined_call_operand.vmem [shape: f32[1,128], index: 2, kind: input, shape index: {}]
  %s3 = inlined_call_operand.vmem [shape: f32[1,128], index: 3, kind: input, shape index: {}]
  %s4 = inlined_call_operand.vmem [shape: bf16[3,384,128], index: 4, kind: input, shape index: {}]
  %s5 = inlined_call_operand.vmem [shape: f32[1,128], index: 5, kind: input, shape index: {}]
  %s6 = inlined_call_operand.vmem [shape: f32[1,128], index: 6, kind: input, shape index: {}]
  %s7 = inlined_call_operand.vmem [shape: bf16[128,128], index: 7, kind: input, shape index: {}]
  %s8 = inlined_call_operand.vmem [shape: f32[1,128], index: 8, kind: input, shape index: {}]
  %s9 = inlined_call_operand.vmem [shape: f32[1,128], index: 9, kind: input, shape index: {}]
  %s10 = inlined_call_operand.vmem [shape: f32[2,64,128], index: 10, kind: output, shape index: {}]
  %s11 = sld [smem:[#allocation0]]
  $region73: #{basic_block_forward.1} parent=0
    _
  %s13 = ssub.s32 1, %s11
  %s14 = scalar_select 0, %s13, %s11
  loop: start=0, step=1, limit=4
  $region2: #{basic_block_forward.1} parent=0 // loop_pre_header
    _
  $region3: #{basic_block_forward.1} parent=0 // loop_header
    %s16 = sphi 0, %s20
    %p17 = scmp.ge.s32.totalorder %s16, 4
    %s26 = sphi 0, %s28
    %s29 = sphi 0, %s26
    %s30 = sphi 0, %s29
    %s46 = sphi 0, %s30
    %s50 = sphi 0, %s50
    %s52 = sphi 0, %s50
    %s53 = sphi 0, %s52
    %s67 = sphi 0, %s53
    %s71 = sphi 0, %s71
    %s73 = sphi 0, %s71
    %s74 = sphi 0, %s73
    %s88 = sphi 0, %s74
    %s92 = sphi 0, %s92
    %s94 = sphi 0, %s92
    %s95 = sphi 0, %s94
    %s109 = sphi 0, %s95
    %s113 = sphi 0, %s113
    %s115 = sphi 0, %s113
    %s116 = sphi 0, %s115
    %s130 = sphi 0, %s116
    %s134 = sphi 0, %s134
    %s136 = sphi 0, %s134
    %s137 = sphi 0, %s136
    %s151 = sphi 0, %s137
    %s155 = sphi 0, %s155
    %s157 = sphi 0, %s155
    %s158 = sphi 0, %s157
    %s172 = sphi 0, %s158
    %s176 = sphi 0, %s176
    %s178 = sphi 0, %s176
    %s179 = sphi 0, %s178
    %s193 = sphi 0, %s179
    %s197 = sphi 0, %s197
    %s199 = sphi 0, %s197
    %s200 = sphi 0, %s199
    %s214 = sphi 0, %s200
    %s218 = sphi 0, %s218
    %s220 = sphi 0, %s218
    %s221 = sphi 0, %s220
    %s235 = sphi 0, %s221
    %s241 = sphi 0, %s243
    %s244 = sphi 0, %s241
    %s245 = sphi 0, %s244
    %s261 = sphi 0, %s245
  $region4: #{basic_block_forward.1} parent=0 // loop_header_branch
    %19 = sbr.rel (%p17) target = $region8
  $region5: #{basic_block_forward.1} parent=0 // loop_body
    %s21 = ssub.s32 %s16, 1
    %s22 = ssub.s32 %s16, 2
    %s23 = sadd.s32 %s16, 1
    %s24 = ssub.s32 %s16, %s23
    %p25 = scmp.eq.s32.totalorder %s24, 0
    %s27 = sadd.s32 %s26, 1
    %s28 = scalar_select %p25, %s26, %s27
    %p31 = pneg %p25
    %p32 = scmp.eq.s32.totalorder %s16, 1
    %p33 = por %p31, %p32
    %p34 = scmp.ne.s32.totalorder %s26, %s29
    %p35 = scmp.eq.s32.totalorder %s16, 0
    %p36 = por %p34, %p35
    %p37 = scmp.ne.s32.totalorder %s26, %s29
    %p38 = scmp.eq.s32.totalorder %s21, 1
    %p39 = por %p37, %p38
    %p40 = scmp.ne.s32.totalorder %s29, %s30
    %p41 = scmp.eq.s32.totalorder %s21, 0
    %p42 = por %p40, %p41
    %p43 = scmp.ne.s32.totalorder %s29, %s30
    %p44 = scmp.eq.s32.totalorder %s22, 1
    %p45 = por %p43, %p44
    %p47 = scmp.ne.s32.totalorder %s30, %s46
    %p48 = scmp.eq.s32.totalorder %s22, 0
    %p49 = por %p47, %p48
    %s51 = sadd.s32 %s50, 1
    %p54 = scmp.eq.s32.totalorder %s16, 1
    %p55 = scmp.ne.s32.totalorder %s50, %s52
    %p56 = scmp.eq.s32.totalorder %s16, 0
    %p57 = por %p55, %p56
    %p58 = scmp.ne.s32.totalorder %s50, %s52
    %p59 = scmp.eq.s32.totalorder %s21, 1
    %p60 = por %p58, %p59
    %p61 = scmp.ne.s32.totalorder %s52, %s53
    %p62 = scmp.eq.s32.totalorder %s21, 0
    %p63 = por %p61, %p62
    %p64 = scmp.ne.s32.totalorder %s52, %s53
    %p65 = scmp.eq.s32.totalorder %s22, 1
    %p66 = por %p64, %p65
    %p68 = scmp.ne.s32.totalorder %s53, %s67
    %p69 = scmp.eq.s32.totalorder %s22, 0
    %p70 = por %p68, %p69
    %s72 = sadd.s32 %s71, 1
    %p75 = scmp.eq.s32.totalorder %s16, 1
    %p76 = scmp.ne.s32.totalorder %s71, %s73
    %p77 = scmp.eq.s32.totalorder %s16, 0
    %p78 = por %p76, %p77
    %p79 = scmp.ne.s32.totalorder %s71, %s73
    %p80 = scmp.eq.s32.totalorder %s21, 1
    %p81 = por %p79, %p80
    %p82 = scmp.ne.s32.totalorder %s73, %s74
    %p83 = scmp.eq.s32.totalorder %s21, 0
    %p84 = por %p82, %p83
    %p85 = scmp.ne.s32.totalorder %s73, %s74
    %p86 = scmp.eq.s32.totalorder %s22, 1
    %p87 = por %p85, %p86
    %p89 = scmp.ne.s32.totalorder %s74, %s88
    %p90 = scmp.eq.s32.totalorder %s22, 0
    %p91 = por %p89, %p90
    %s93 = sadd.s32 %s92, 1
    %p96 = scmp.eq.s32.totalorder %s16, 1
    %p97 = scmp.ne.s32.totalorder %s92, %s94
    %p98 = scmp.eq.s32.totalorder %s16, 0
    %p99 = por %p97, %p98
    %p100 = scmp.ne.s32.totalorder %s92, %s94
    %p101 = scmp.eq.s32.totalorder %s21, 1
    %p102 = por %p100, %p101
    %p103 = scmp.ne.s32.totalorder %s94, %s95
    %p104 = scmp.eq.s32.totalorder %s21, 0
    %p105 = por %p103, %p104
    %p106 = scmp.ne.s32.totalorder %s94, %s95
    %p107 = scmp.eq.s32.totalorder %s22, 1
    %p108 = por %p106, %p107
    %p110 = scmp.ne.s32.totalorder %s95, %s109
    %p111 = scmp.eq.s32.totalorder %s22, 0
    %p112 = por %p110, %p111
    %s114 = sadd.s32 %s113, 1
    %p117 = scmp.eq.s32.totalorder %s16, 1
    %p118 = scmp.ne.s32.totalorder %s113, %s115
    %p119 = scmp.eq.s32.totalorder %s16, 0
    %p120 = por %p118, %p119
    %p121 = scmp.ne.s32.totalorder %s113, %s115
    %p122 = scmp.eq.s32.totalorder %s21, 1
    %p123 = por %p121, %p122
    %p124 = scmp.ne.s32.totalorder %s115, %s116
    %p125 = scmp.eq.s32.totalorder %s21, 0
    %p126 = por %p124, %p125
    %p127 = scmp.ne.s32.totalorder %s115, %s116
    %p128 = scmp.eq.s32.totalorder %s22, 1
    %p129 = por %p127, %p128
    %p131 = scmp.ne.s32.totalorder %s116, %s130
    %p132 = scmp.eq.s32.totalorder %s22, 0
    %p133 = por %p131, %p132
    %s135 = sadd.s32 %s134, 1
    %p138 = scmp.eq.s32.totalorder %s16, 1
    %p139 = scmp.ne.s32.totalorder %s134, %s136
    %p140 = scmp.eq.s32.totalorder %s16, 0
    %p141 = por %p139, %p140
    %p142 = scmp.ne.s32.totalorder %s134, %s136
    %p143 = scmp.eq.s32.totalorder %s21, 1
    %p144 = por %p142, %p143
    %p145 = scmp.ne.s32.totalorder %s136, %s137
    %p146 = scmp.eq.s32.totalorder %s21, 0
    %p147 = por %p145, %p146
    %p148 = scmp.ne.s32.totalorder %s136, %s137
    %p149 = scmp.eq.s32.totalorder %s22, 1
    %p150 = por %p148, %p149
    %p152 = scmp.ne.s32.totalorder %s137, %s151
    %p153 = scmp.eq.s32.totalorder %s22, 0
    %p154 = por %p152, %p153
    %s156 = sadd.s32 %s155, 1
    %p159 = scmp.eq.s32.totalorder %s16, 1
    %p160 = scmp.ne.s32.totalorder %s155, %s157
    %p161 = scmp.eq.s32.totalorder %s16, 0
    %p162 = por %p160, %p161
    %p163 = scmp.ne.s32.totalorder %s155, %s157
    %p164 = scmp.eq.s32.totalorder %s21, 1
    %p165 = por %p163, %p164
    %p166 = scmp.ne.s32.totalorder %s157, %s158
    %p167 = scmp.eq.s32.totalorder %s21, 0
    %p168 = por %p166, %p167
    %p169 = scmp.ne.s32.totalorder %s157, %s158
    %p170 = scmp.eq.s32.totalorder %s22, 1
    %p171 = por %p169, %p170
    %p173 = scmp.ne.s32.totalorder %s158, %s172
    %p174 = scmp.eq.s32.totalorder %s22, 0
    %p175 = por %p173, %p174
    %s177 = sadd.s32 %s176, 1
    %p180 = scmp.eq.s32.totalorder %s16, 1
    %p181 = scmp.ne.s32.totalorder %s176, %s178
    %p182 = scmp.eq.s32.totalorder %s16, 0
    %p183 = por %p181, %p182
    %p184 = scmp.ne.s32.totalorder %s176, %s178
    %p185 = scmp.eq.s32.totalorder %s21, 1
    %p186 = por %p184, %p185
    %p187 = scmp.ne.s32.totalorder %s178, %s179
    %p188 = scmp.eq.s32.totalorder %s21, 0
    %p189 = por %p187, %p188
    %p190 = scmp.ne.s32.totalorder %s178, %s179
    %p191 = scmp.eq.s32.totalorder %s22, 1
    %p192 = por %p190, %p191
    %p194 = scmp.ne.s32.totalorder %s179, %s193
    %p195 = scmp.eq.s32.totalorder %s22, 0
    %p196 = por %p194, %p195
    %s198 = sadd.s32 %s197, 1
    %p201 = scmp.eq.s32.totalorder %s16, 1
    %p202 = scmp.ne.s32.totalorder %s197, %s199
    %p203 = scmp.eq.s32.totalorder %s16, 0
    %p204 = por %p202, %p203
    %p205 = scmp.ne.s32.totalorder %s197, %s199
    %p206 = scmp.eq.s32.totalorder %s21, 1
    %p207 = por %p205, %p206
    %p208 = scmp.ne.s32.totalorder %s199, %s200
    %p209 = scmp.eq.s32.totalorder %s21, 0
    %p210 = por %p208, %p209
    %p211 = scmp.ne.s32.totalorder %s199, %s200
    %p212 = scmp.eq.s32.totalorder %s22, 1
    %p213 = por %p211, %p212
    %p215 = scmp.ne.s32.totalorder %s200, %s214
    %p216 = scmp.eq.s32.totalorder %s22, 0
    %p217 = por %p215, %p216
    %s219 = sadd.s32 %s218, 1
    %p222 = scmp.eq.s32.totalorder %s16, 1
    %p223 = scmp.ne.s32.totalorder %s218, %s220
    %p224 = scmp.eq.s32.totalorder %s16, 0
    %p225 = por %p223, %p224
    %p226 = scmp.ne.s32.totalorder %s218, %s220
    %p227 = scmp.eq.s32.totalorder %s21, 1
    %p228 = por %p226, %p227
    %p229 = scmp.ne.s32.totalorder %s220, %s221
    %p230 = scmp.eq.s32.totalorder %s21, 0
    %p231 = por %p229, %p230
    %p232 = scmp.ne.s32.totalorder %s220, %s221
    %p233 = scmp.eq.s32.totalorder %s22, 1
    %p234 = por %p232, %p233
    %p236 = scmp.ne.s32.totalorder %s221, %s235
    %p237 = scmp.eq.s32.totalorder %s22, 0
    %p238 = por %p236, %p237
    %s239 = ssub.s32 %s16, %s23
    %p240 = scmp.eq.s32.totalorder %s239, 0
    %s242 = sadd.s32 %s241, 1
    %s243 = scalar_select %p240, %s241, %s242
    %p246 = pneg %p240
    %p247 = scmp.eq.s32.totalorder %s16, 1
    %p248 = por %p246, %p247
    %p249 = scmp.ne.s32.totalorder %s241, %s244
    %p250 = scmp.eq.s32.totalorder %s16, 0
    %p251 = por %p249, %p250
    %p252 = scmp.ne.s32.totalorder %s241, %s244
    %p253 = scmp.eq.s32.totalorder %s21, 1
    %p254 = por %p252, %p253
    %p255 = scmp.ne.s32.totalorder %s244, %s245
    %p256 = scmp.eq.s32.totalorder %s21, 0
    %p257 = por %p255, %p256
    %p258 = scmp.ne.s32.totalorder %s244, %s245
    %p259 = scmp.eq.s32.totalorder %s22, 1
    %p260 = por %p258, %p259
    %p262 = scmp.ne.s32.totalorder %s245, %s261
    %p263 = scmp.eq.s32.totalorder %s22, 0
    %p264 = por %p262, %p263
    %p265 = scmp.le.s32.totalorder 1, %s16
    %p266 = scmp.lt.s32.totalorder %s16, 3
    %p267 = pnand %p265, %p266
    %p268 = pneg %p267
    // Predicated region
    $region9: #{basic_block_forward.1} parent=5 // pred_check
      _
    $region10: #{basic_block_forward.1} parent=5 // pred_check_branch
      %270 = sbr.rel (%p267) target = $region12
    $region11: #{basic_block_forward.1} parent=5 // pred_region
      %s271 = ssub.s32 %s16, 1
      // Predicated region
      $region13: #{basic_block_forward.1} parent=11 // pred_check
        %p272 = pneg %p63
      $region14: #{basic_block_forward.1} parent=11 // pred_check_branch
        %274 = sbr.rel (%p272) target = $region16
      $region15: #{basic_block_forward.1} parent=11 // pred_region
        _
      $region16: #{basic_block_forward.1} parent=11 // pred_fallthru
        _
      // Predicated region
      $region17: #{basic_block_forward.1} parent=11 // pred_check
        %p275 = pneg %p84
      $region18: #{basic_block_forward.1} parent=11 // pred_check_branch
        %277 = sbr.rel (%p275) target = $region20
      $region19: #{basic_block_forward.1} parent=11 // pred_region
        _
      $region20: #{basic_block_forward.1} parent=11 // pred_fallthru
        _
      // Predicated region
      $region21: #{basic_block_forward.1} parent=11 // pred_check
        %p278 = pneg %p105
      $region22: #{basic_block_forward.1} parent=11 // pred_check_branch
        %280 = sbr.rel (%p278) target = $region24
      $region23: #{basic_block_forward.1} parent=11 // pred_region
        _
      $region24: #{basic_block_forward.1} parent=11 // pred_fallthru
        _
      // Predicated region
      $region25: #{basic_block_forward.1} parent=11 // pred_check
        %p281 = pneg %p126
      $region26: #{basic_block_forward.1} parent=11 // pred_check_branch
        %283 = sbr.rel (%p281) target = $region28
      $region27: #{basic_block_forward.1} parent=11 // pred_region
        _
      $region28: #{basic_block_forward.1} parent=11 // pred_fallthru
        _
      // Predicated region
      $region29: #{basic_block_forward.1} parent=11 // pred_check
        %p284 = pneg %p147
      $region30: #{basic_block_forward.1} parent=11 // pred_check_branch
        %286 = sbr.rel (%p284) target = $region32
      $region31: #{basic_block_forward.1} parent=11 // pred_region
        _
      $region32: #{basic_block_forward.1} parent=11 // pred_fallthru
        _
      // Predicated region
      $region33: #{basic_block_forward.1} parent=11 // pred_check
        %p287 = pneg %p168
      $region34: #{basic_block_forward.1} parent=11 // pred_check_branch
        %289 = sbr.rel (%p287) target = $region36
      $region35: #{basic_block_forward.1} parent=11 // pred_region
        _
      $region36: #{basic_block_forward.1} parent=11 // pred_fallthru
        _
      // Predicated region
      $region37: #{basic_block_forward.1} parent=11 // pred_check
        %p290 = pneg %p189
      $region38: #{basic_block_forward.1} parent=11 // pred_check_branch
        %292 = sbr.rel (%p290) target = $region40
      $region39: #{basic_block_forward.1} parent=11 // pred_region
        _
      $region40: #{basic_block_forward.1} parent=11 // pred_fallthru
        _
      // Predicated region
      $region41: #{basic_block_forward.1} parent=11 // pred_check
        %p293 = pneg %p210
      $region42: #{basic_block_forward.1} parent=11 // pred_check_branch
        %295 = sbr.rel (%p293) target = $region44
      $region43: #{basic_block_forward.1} parent=11 // pred_region
        _
      $region44: #{basic_block_forward.1} parent=11 // pred_fallthru
        _
      // Predicated region
      $region45: #{basic_block_forward.1} parent=11 // pred_check
        %p296 = pneg %p231
      $region46: #{basic_block_forward.1} parent=11 // pred_check_branch
        %298 = sbr.rel (%p296) target = $region48
      $region47: #{basic_block_forward.1} parent=11 // pred_region
        _
      $region48: #{basic_block_forward.1} parent=11 // pred_fallthru
        _
    $region12: #{basic_block_forward.1} parent=5 // pred_fallthru
      _
    %p299 = scmp.lt.s32.totalorder %s16, 2
    // Predicated region
    $region49: #{basic_block_forward.1} parent=5 // pred_check
      %p300 = pneg %p299
    $region50: #{basic_block_forward.1} parent=5 // pred_check_branch
      %302 = sbr.rel (%p300) target = $region52
    $region51: #{basic_block_forward.1} parent=5 // pred_region
      // Predicated region
      $region53: #{basic_block_forward.1} parent=51 // pred_check
        %p303 = pneg %p36
      $region54: #{basic_block_forward.1} parent=51 // pred_check_branch
        %305 = sbr.rel (%p303) target = $region56
      $region55: #{basic_block_forward.1} parent=51 // pred_region
        %p306 = scmp.lt.s32.totalorder %s16, 1
        %s307 = scalar_select %p306, %s16, 1
        %s308 = smul.addr %s307, 72
        %s309 = smul.addr %s308, 4
        %s310 = scalar_lea.vmem %s0, %s309
      $region56: #{basic_block_forward.1} parent=51 // pred_fallthru
        _
    $region52: #{basic_block_forward.1} parent=5 // pred_fallthru
      _
    %p311 = scmp.le.s32.totalorder 1, %s16
    %p312 = scmp.lt.s32.totalorder %s16, 3
    %p313 = pnand %p311, %p312
    %p314 = pneg %p313
    // Predicated region
    $region57: #{basic_block_forward.1} parent=5 // pred_check
      _
    $region58: #{basic_block_forward.1} parent=5 // pred_check_branch
      %316 = sbr.rel (%p313) target = $region60
    $region59: #{basic_block_forward.1} parent=5 // pred_region
      %s317 = ssub.s32 %s16, 1
      %p318 = scmp.lt.s32.totalorder %s21, 1
      %s319 = scalar_select %p318, %s21, 1
      %s320 = smul.addr %s319, 72
      %s321 = smul.addr %s320, 4
      %s322 = scalar_lea.vmem %s0, %s321
      %p323 = pneg %p42
      %p324 = pneg %p39
      %p325 = pneg %p63
      %p326 = pneg %p60
      %p327 = pneg %p84
      %p328 = pneg %p81
      %p329 = pneg %p105
      %p330 = pneg %p102
      %p331 = pneg %p126
      %p332 = pneg %p123
      %p333 = pneg %p147
      %p334 = pneg %p144
      %p335 = pneg %p168
      %p336 = pneg %p165
      %p337 = pneg %p189
      %p338 = pneg %p186
      %p339 = pneg %p210
      %p340 = pneg %p207
      %p341 = pneg %p231
      %p342 = pneg %p228
      %p343 = pneg %p257
      %p344 = pneg %p254
      %p345 = scmp.lt.s32.totalorder %s21, 1
      %s346 = scalar_select %p345, %s21, 1
      %s347 = smul.addr %s346, 8
      %s348 = smul.addr %s347, 8
      %s349 = scalar_lea.vmem %s10, %s348
      %p350 = scmp.lt.s32.totalorder %s21, 1
      %s351 = scalar_select %p350, %s21, 1
      %s352 = smul.addr %s351, 72
      %s353 = smul.addr %s352, 4
      %s354 = scalar_lea.vmem %s0, %s353
      %p355 = scmp.lt.s32.totalorder %s21, 1
      %s356 = scalar_select %p355, %s21, 1
      %s357 = smul.addr %s356, 8
      %s358 = smul.addr %s357, 8
      %s359 = scalar_lea.vmem %s10, %s358
      %v361 = vld [vmem:[%s354] sm:$0xf]
      %v362 = vld [vmem:[%s354 + $0x4] sm:$0x1]
      %v363 = vld [vmem:[%s354 + $0x8] sm:$0xf]
      %v364 = vld [vmem:[%s354 + $0xc] sm:$0x1]
      %v365 = vld [vmem:[%s354 + $0x10] sm:$0xf]
      %v366 = vld [vmem:[%s354 + $0x14] sm:$0x1]
      %v367 = vld [vmem:[%s354 + $0x18] sm:$0xf]
      %v368 = vld [vmem:[%s354 + $0x1c] sm:$0x1]
      %v369 = vld [vmem:[%s354 + $0x20] sm:$0xf]
      %v370 = vld [vmem:[%s354 + $0x24] sm:$0x1]
      %v371 = vld [vmem:[%s354 + $0x28] sm:$0xf]
      %v372 = vld [vmem:[%s354 + $0x2c] sm:$0x1]
      %v373 = vld [vmem:[%s354 + $0x30] sm:$0xf]
      %v374 = vld [vmem:[%s354 + $0x34] sm:$0x1]
      %v375 = vld [vmem:[%s354 + $0x38] sm:$0xf]
      %v376 = vld [vmem:[%s354 + $0x3c] sm:$0x1]
      %v377 = vld [vmem:[%s354 + $0x40] sm:$0xf]
      %v378 = vld [vmem:[%s354 + $0x44] sm:$0x1]
      %v379 = vld [vmem:[%s354 + $0x48] sm:$0xf]
      %v380 = vld [vmem:[%s354 + $0x50] sm:$0xf]
      %v381 = vld [vmem:[%s354 + $0x58] sm:$0xf]
      %v382 = vld [vmem:[%s354 + $0x60] sm:$0xf]
      %v383 = vld [vmem:[%s354 + $0x68] sm:$0xf]
      %v384 = vld [vmem:[%s354 + $0x70] sm:$0xf]
      %v385 = vld [vmem:[%s354 + $0x78] sm:$0xf]
      %v386 = vld [vmem:[%s354 + $0x80] sm:$0xf]
      %v387 = vld [vmem:[%s354 + $0x88] sm:$0xf]
      %v388 = vld [vmem:[%s354 + $0x90] sm:$0xf]
      %v389 = vld [vmem:[%s354 + $0x94] sm:$0x1]
      %v390 = vld [vmem:[%s354 + $0x98] sm:$0xf]
      %v391 = vld [vmem:[%s354 + $0x9c] sm:$0x1]
      %v392 = vld [vmem:[%s354 + $0xa0] sm:$0xf]
      %v393 = vld [vmem:[%s354 + $0xa4] sm:$0x1]
      %v394 = vld [vmem:[%s354 + $0xa8] sm:$0xf]
      %v395 = vld [vmem:[%s354 + $0xac] sm:$0x1]
      %v396 = vld [vmem:[%s354 + $0xb0] sm:$0xf]
      %v397 = vld [vmem:[%s354 + $0xb4] sm:$0x1]
      %v398 = vld [vmem:[%s354 + $0xb8] sm:$0xf]
      %v399 = vld [vmem:[%s354 + $0xbc] sm:$0x1]
      %v400 = vld [vmem:[%s354 + $0xc0] sm:$0xf]
      %v401 = vld [vmem:[%s354 + $0xc4] sm:$0x1]
      %v402 = vld [vmem:[%s354 + $0xc8] sm:$0xf]
      %v403 = vld [vmem:[%s354 + $0xcc] sm:$0x1]
      %v404 = vld [vmem:[%s354 + $0xd8] sm:$0xf]
      %v405 = vld [vmem:[%s354 + $0xe0] sm:$0xf]
      %v406 = vld [vmem:[%s354 + $0xe8] sm:$0xf]
      %v407 = vld [vmem:[%s354 + $0xf0] sm:$0xf]
      %v408 = vld [vmem:[%s354 + $0xf8] sm:$0xf]
      %v409 = vld [vmem:[%s354 + $0x100] sm:$0xf]
      %v410 = vld [vmem:[%s354 + $0x108] sm:$0xf]
      %v411 = vld [vmem:[%s354 + $0x110] sm:$0xf]
      %v428 = vunpack.c.l.b16 %v361
      %v429 = vunpack.c.l.b16 %v362
      %v430 = vunpack.c.l.b16 %v363
      %v431 = vunpack.c.l.b16 %v364
      %v432 = vunpack.c.l.b16 %v365
      %v433 = vunpack.c.l.b16 %v366
      %v434 = vunpack.c.l.b16 %v367
      %v435 = vunpack.c.l.b16 %v368
      %v436 = vunpack.c.l.b16 %v369
      %v437 = vunpack.c.l.b16 %v370
      %v438 = vunpack.c.l.b16 %v371
      %v439 = vunpack.c.l.b16 %v372
      %v440 = vunpack.c.l.b16 %v373
      %v441 = vunpack.c.l.b16 %v374
      %v442 = vunpack.c.l.b16 %v375
      %v443 = vunpack.c.l.b16 %v376
      %v444 = vpack.c.b16 %v429, %v428
      %v445 = vpack.c.b16 %v431, %v430
      %v446 = vpack.c.b16 %v433, %v432
      %v447 = vpack.c.b16 %v435, %v434
      %v448 = vpack.c.b16 %v437, %v436
      %v449 = vpack.c.b16 %v439, %v438
      %v450 = vpack.c.b16 %v441, %v440
      %v451 = vpack.c.b16 %v443, %v442
      %v453 = vshrl.u32 %v444, 16
      %v455 = vshll.u32 %v444, 16
      %v457 = vrot.slane %v455, 1
      %v458 = vor.u32 %v453, %v457
      %v460 = vshrl.u32 %v445, 16
      %v462 = vshll.u32 %v445, 16
      %v464 = vrot.slane %v462, 1
      %v465 = vor.u32 %v460, %v464
      %v467 = vshrl.u32 %v446, 16
      %v469 = vshll.u32 %v446, 16
      %v471 = vrot.slane %v469, 1
      %v472 = vor.u32 %v467, %v471
      %v474 = vshrl.u32 %v447, 16
      %v476 = vshll.u32 %v447, 16
      %v478 = vrot.slane %v476, 1
      %v479 = vor.u32 %v474, %v478
      %v481 = vshrl.u32 %v448, 16
      %v483 = vshll.u32 %v448, 16
      %v485 = vrot.slane %v483, 1
      %v486 = vor.u32 %v481, %v485
      %v488 = vshrl.u32 %v449, 16
      %v490 = vshll.u32 %v449, 16
      %v492 = vrot.slane %v490, 1
      %v493 = vor.u32 %v488, %v492
      %v495 = vshrl.u32 %v450, 16
      %v497 = vshll.u32 %v450, 16
      %v499 = vrot.slane %v497, 1
      %v500 = vor.u32 %v495, %v499
      %v502 = vshrl.u32 %v451, 16
      %v504 = vshll.u32 %v451, 16
      %v506 = vrot.slane %v504, 1
      %v507 = vor.u32 %v502, %v506
      %v516 = vunpack.c.l.b16 %v379
      %v517 = vunpack.c.l.b16 %v458
      %v518 = vunpack.c.l.b16 %v380
      %v519 = vunpack.c.l.b16 %v465
      %v520 = vunpack.c.l.b16 %v381
      %v521 = vunpack.c.l.b16 %v472
      %v522 = vunpack.c.l.b16 %v382
      %v523 = vunpack.c.l.b16 %v479
      %v524 = vunpack.c.l.b16 %v383
      %v525 = vunpack.c.l.b16 %v486
      %v526 = vunpack.c.l.b16 %v384
      %v527 = vunpack.c.l.b16 %v493
      %v528 = vunpack.c.l.b16 %v385
      %v529 = vunpack.c.l.b16 %v500
      %v530 = vunpack.c.l.b16 %v386
      %v531 = vunpack.c.l.b16 %v507
      %v532 = vld [vmem:[%s1] sm:$0xf]
      %v533 = vld [vmem:[%s1 + $0x4] sm:$0xf]
      %v534 = vld [vmem:[%s1 + $0x8] sm:$0xf]
      %v535 = vld [vmem:[%s1 + $0xc] sm:$0xf]
      %v536 = vld [vmem:[%s1 + $0x10] sm:$0xf]
      %v537 = vld [vmem:[%s1 + $0x14] sm:$0xf]
      %v538 = vld [vmem:[%s1 + $0x18] sm:$0xf]
      %v539 = vld [vmem:[%s1 + $0x1c] sm:$0xf]
      %v540 = vld [vmem:[%s1 + $0x20] sm:$0xf]
      %v541 = vld [vmem:[%s1 + $0x24] sm:$0xf]
      %v542 = vld [vmem:[%s1 + $0x28] sm:$0xf]
      %v543 = vld [vmem:[%s1 + $0x2c] sm:$0xf]
      %v544 = vld [vmem:[%s1 + $0x30] sm:$0xf]
      %v545 = vld [vmem:[%s1 + $0x34] sm:$0xf]
      %v546 = vld [vmem:[%s1 + $0x38] sm:$0xf]
      %v547 = vld [vmem:[%s1 + $0x3c] sm:$0xf]
      %v548 = vld [vmem:[%s1 + $0x40] sm:$0xf]
      %v549 = vld [vmem:[%s1 + $0x44] sm:$0xf]
      %v550 = vld [vmem:[%s1 + $0x48] sm:$0xf]
      %v551 = vld [vmem:[%s1 + $0x4c] sm:$0xf]
      %v552 = vld [vmem:[%s1 + $0x50] sm:$0xf]
      %v553 = vld [vmem:[%s1 + $0x54] sm:$0xf]
      %v554 = vld [vmem:[%s1 + $0x58] sm:$0xf]
      %v555 = vld [vmem:[%s1 + $0x5c] sm:$0xf]
      %v556 = vld [vmem:[%s1 + $0x60] sm:$0xf]
      %v557 = vld [vmem:[%s1 + $0x64] sm:$0xf]
      %v558 = vld [vmem:[%s1 + $0x68] sm:$0xf]
      %v559 = vld [vmem:[%s1 + $0x6c] sm:$0xf]
      %v560 = vld [vmem:[%s1 + $0x70] sm:$0xf]
      %v561 = vld [vmem:[%s1 + $0x74] sm:$0xf]
      %v562 = vld [vmem:[%s1 + $0x78] sm:$0xf]
      %v563 = vld [vmem:[%s1 + $0x7c] sm:$0xf]
      %v564 = vld [vmem:[%s1 + $0x80] sm:$0xf]
      %v565 = vld [vmem:[%s1 + $0x84] sm:$0xf]
      %v566 = vld [vmem:[%s1 + $0x88] sm:$0xf]
      %v567 = vld [vmem:[%s1 + $0x8c] sm:$0xf]
      %v568 = vld [vmem:[%s1 + $0x90] sm:$0xf]
      %v569 = vld [vmem:[%s1 + $0x94] sm:$0xf]
      %v570 = vld [vmem:[%s1 + $0x98] sm:$0xf]
      %v571 = vld [vmem:[%s1 + $0x9c] sm:$0xf]
      %v572 = vld [vmem:[%s1 + $0xa0] sm:$0xf]
      %v573 = vld [vmem:[%s1 + $0xa4] sm:$0xf]
      %v574 = vld [vmem:[%s1 + $0xa8] sm:$0xf]
      %v575 = vld [vmem:[%s1 + $0xac] sm:$0xf]
      %v576 = vld [vmem:[%s1 + $0xb0] sm:$0xf]
      %v577 = vld [vmem:[%s1 + $0xb4] sm:$0xf]
      %v578 = vld [vmem:[%s1 + $0xb8] sm:$0xf]
      %v579 = vld [vmem:[%s1 + $0xbc] sm:$0xf]
      %v596 = vunpack.c.l.b16 %v388
      %v597 = vunpack.c.l.b16 %v389
      %v598 = vunpack.c.l.b16 %v390
      %v599 = vunpack.c.l.b16 %v391
      %v600 = vunpack.c.l.b16 %v392
      %v601 = vunpack.c.l.b16 %v393
      %v602 = vunpack.c.l.b16 %v394
      %v603 = vunpack.c.l.b16 %v395
      %v604 = vunpack.c.l.b16 %v396
      %v605 = vunpack.c.l.b16 %v397
      %v606 = vunpack.c.l.b16 %v398
      %v607 = vunpack.c.l.b16 %v399
      %v608 = vunpack.c.l.b16 %v400
      %v609 = vunpack.c.l.b16 %v401
      %v610 = vunpack.c.l.b16 %v402
      %v611 = vunpack.c.l.b16 %v403
      %v612 = vpack.c.b16 %v597, %v596
      %v613 = vpack.c.b16 %v599, %v598
      %v614 = vpack.c.b16 %v601, %v600
      %v615 = vpack.c.b16 %v603, %v602
      %v616 = vpack.c.b16 %v605, %v604
      %v617 = vpack.c.b16 %v607, %v606
      %v618 = vpack.c.b16 %v609, %v608
      %v619 = vpack.c.b16 %v611, %v610
      %v621 = vshrl.u32 %v612, 16
      %v623 = vshll.u32 %v612, 16
      %v625 = vrot.slane %v623, 1
      %v626 = vor.u32 %v621, %v625
      %v628 = vshrl.u32 %v613, 16
      %v630 = vshll.u32 %v613, 16
      %v632 = vrot.slane %v630, 1
      %v633 = vor.u32 %v628, %v632
      %v635 = vshrl.u32 %v614, 16
      %v637 = vshll.u32 %v614, 16
      %v639 = vrot.slane %v637, 1
      %v640 = vor.u32 %v635, %v639
      %v642 = vshrl.u32 %v615, 16
      %v644 = vshll.u32 %v615, 16
      %v646 = vrot.slane %v644, 1
      %v647 = vor.u32 %v642, %v646
      %v649 = vshrl.u32 %v616, 16
      %v651 = vshll.u32 %v616, 16
      %v653 = vrot.slane %v651, 1
      %v654 = vor.u32 %v649, %v653
      %v656 = vshrl.u32 %v617, 16
      %v658 = vshll.u32 %v617, 16
      %v660 = vrot.slane %v658, 1
      %v661 = vor.u32 %v656, %v660
      %v663 = vshrl.u32 %v618, 16
      %v665 = vshll.u32 %v618, 16
      %v667 = vrot.slane %v665, 1
      %v668 = vor.u32 %v663, %v667
      %v670 = vshrl.u32 %v619, 16
      %v672 = vshll.u32 %v619, 16
      %v674 = vrot.slane %v672, 1
      %v675 = vor.u32 %v670, %v674
      %v684 = vunpack.c.l.b16 %v404
      %v685 = vunpack.c.l.b16 %v626
      %v686 = vunpack.c.l.b16 %v405
      %v687 = vunpack.c.l.b16 %v633
      %v688 = vunpack.c.l.b16 %v406
      %v689 = vunpack.c.l.b16 %v640
      %v690 = vunpack.c.l.b16 %v407
      %v691 = vunpack.c.l.b16 %v647
      %v692 = vunpack.c.l.b16 %v408
      %v693 = vunpack.c.l.b16 %v654
      %v694 = vunpack.c.l.b16 %v409
      %v695 = vunpack.c.l.b16 %v661
      %v696 = vunpack.c.l.b16 %v410
      %v697 = vunpack.c.l.b16 %v668
      %v698 = vunpack.c.l.b16 %v411
      %v699 = vunpack.c.l.b16 %v675
      %s700 = scalar_lea.vmem %s1, 192
      %v701 = vld [vmem:[%s700] sm:$0xf]
      %v702 = vld [vmem:[%s700 + $0x4] sm:$0xf]
      %v703 = vld [vmem:[%s700 + $0x8] sm:$0xf]
      %v704 = vld [vmem:[%s700 + $0xc] sm:$0xf]
      %v705 = vld [vmem:[%s700 + $0x10] sm:$0xf]
      %v706 = vld [vmem:[%s700 + $0x14] sm:$0xf]
      %v707 = vld [vmem:[%s700 + $0x18] sm:$0xf]
      %v708 = vld [vmem:[%s700 + $0x1c] sm:$0xf]
      %v709 = vld [vmem:[%s700 + $0x20] sm:$0xf]
      %v710 = vld [vmem:[%s700 + $0x24] sm:$0xf]
      %v711 = vld [vmem:[%s700 + $0x28] sm:$0xf]
      %v712 = vld [vmem:[%s700 + $0x2c] sm:$0xf]
      %v713 = vld [vmem:[%s700 + $0x30] sm:$0xf]
      %v714 = vld [vmem:[%s700 + $0x34] sm:$0xf]
      %v715 = vld [vmem:[%s700 + $0x38] sm:$0xf]
      %v716 = vld [vmem:[%s700 + $0x3c] sm:$0xf]
      %v717 = vld [vmem:[%s700 + $0x40] sm:$0xf]
      %v718 = vld [vmem:[%s700 + $0x44] sm:$0xf]
      %v719 = vld [vmem:[%s700 + $0x48] sm:$0xf]
      %v720 = vld [vmem:[%s700 + $0x4c] sm:$0xf]
      %v721 = vld [vmem:[%s700 + $0x50] sm:$0xf]
      %v722 = vld [vmem:[%s700 + $0x54] sm:$0xf]
      %v723 = vld [vmem:[%s700 + $0x58] sm:$0xf]
      %v724 = vld [vmem:[%s700 + $0x5c] sm:$0xf]
      %v725 = vld [vmem:[%s700 + $0x60] sm:$0xf]
      %v726 = vld [vmem:[%s700 + $0x64] sm:$0xf]
      %v727 = vld [vmem:[%s700 + $0x68] sm:$0xf]
      %v728 = vld [vmem:[%s700 + $0x6c] sm:$0xf]
      %v729 = vld [vmem:[%s700 + $0x70] sm:$0xf]
      %v730 = vld [vmem:[%s700 + $0x74] sm:$0xf]
      %v731 = vld [vmem:[%s700 + $0x78] sm:$0xf]
      %v732 = vld [vmem:[%s700 + $0x7c] sm:$0xf]
      %v733 = vld [vmem:[%s700 + $0x80] sm:$0xf]
      %v734 = vld [vmem:[%s700 + $0x84] sm:$0xf]
      %v735 = vld [vmem:[%s700 + $0x88] sm:$0xf]
      %v736 = vld [vmem:[%s700 + $0x8c] sm:$0xf]
      %v737 = vld [vmem:[%s700 + $0x90] sm:$0xf]
      %v738 = vld [vmem:[%s700 + $0x94] sm:$0xf]
      %v739 = vld [vmem:[%s700 + $0x98] sm:$0xf]
      %v740 = vld [vmem:[%s700 + $0x9c] sm:$0xf]
      %v741 = vld [vmem:[%s700 + $0xa0] sm:$0xf]
      %v742 = vld [vmem:[%s700 + $0xa4] sm:$0xf]
      %v743 = vld [vmem:[%s700 + $0xa8] sm:$0xf]
      %v744 = vld [vmem:[%s700 + $0xac] sm:$0xf]
      %v745 = vld [vmem:[%s700 + $0xb0] sm:$0xf]
      %v746 = vld [vmem:[%s700 + $0xb4] sm:$0xf]
      %v747 = vld [vmem:[%s700 + $0xb8] sm:$0xf]
      %v748 = vld [vmem:[%s700 + $0xbc] sm:$0xf]
      %v749 = vpack.c.b16 %v598, %v596
      %v750 = vpack.c.b16 %v686, %v684
      %v751 = vpack.c.b16 %v687, %v685
      %v752 = vpack.c.b16 %v602, %v600
      %v753 = vpack.c.b16 %v690, %v688
      %v754 = vpack.c.b16 %v691, %v689
      %v755 = vpack.c.b16 %v606, %v604
      %v756 = vpack.c.b16 %v694, %v692
      %v757 = vpack.c.b16 %v695, %v693
      %v758 = vpack.c.b16 %v610, %v608
      %v759 = vpack.c.b16 %v698, %v696
      %v760 = vpack.c.b16 %v699, %v697
      %v821 = vunpack.c.l.b16 %v701
      %v822 = vunpack.c.l.b16 %v702
      %v823 = vunpack.c.l.b16 %v703
      %v824 = vunpack.c.l.b16 %v704
      %v825 = vunpack.c.l.b16 %v705
      %v826 = vunpack.c.l.b16 %v706
      %v827 = vunpack.c.l.b16 %v707
      %v828 = vunpack.c.l.b16 %v708
      %v829 = vunpack.c.l.b16 %v709
      %v830 = vunpack.c.l.b16 %v710
      %v831 = vunpack.c.l.b16 %v711
      %v832 = vunpack.c.l.b16 %v712
      %v833 = vunpack.c.l.b16 %v713
      %v834 = vunpack.c.l.b16 %v714
      %v835 = vunpack.c.l.b16 %v715
      %v836 = vunpack.c.l.b16 %v716
      %v837 = vunpack.c.l.b16 %v717
      %v838 = vunpack.c.l.b16 %v718
      %v839 = vunpack.c.l.b16 %v719
      %v840 = vunpack.c.l.b16 %v720
      %v841 = vunpack.c.l.b16 %v721
      %v842 = vunpack.c.l.b16 %v722
      %v843 = vunpack.c.l.b16 %v723
      %v844 = vunpack.c.l.b16 %v724
      %v845 = vunpack.c.l.b16 %v725
      %v846 = vunpack.c.l.b16 %v726
      %v847 = vunpack.c.l.b16 %v727
      %v848 = vunpack.c.l.b16 %v728
      %v849 = vunpack.c.l.b16 %v729
      %v850 = vunpack.c.l.b16 %v730
      %v851 = vunpack.c.l.b16 %v731
      %v852 = vunpack.c.l.b16 %v732
      %v853 = vunpack.c.l.b16 %v733
      %v854 = vunpack.c.l.b16 %v734
      %v855 = vunpack.c.l.b16 %v735
      %v856 = vunpack.c.l.b16 %v736
      %v857 = vunpack.c.l.b16 %v737
      %v858 = vunpack.c.l.b16 %v738
      %v859 = vunpack.c.l.b16 %v739
      %v860 = vunpack.c.l.b16 %v740
      %v861 = vunpack.c.l.b16 %v741
      %v862 = vunpack.c.l.b16 %v742
      %v863 = vunpack.c.l.b16 %v743
      %v864 = vunpack.c.l.b16 %v744
      %v865 = vunpack.c.l.b16 %v745
      %v866 = vunpack.c.l.b16 %v746
      %v867 = vunpack.c.l.b16 %v747
      %v868 = vunpack.c.l.b16 %v748
      %v869 = vpack.c.b16 %v822, %v821
      %v870 = vpack.c.b16 %v824, %v823
      %v871 = vpack.c.b16 %v826, %v825
      %v872 = vpack.c.b16 %v828, %v827
      %v873 = vpack.c.b16 %v830, %v829
      %v874 = vpack.c.b16 %v832, %v831
      %v875 = vpack.c.b16 %v834, %v833
      %v876 = vpack.c.b16 %v836, %v835
      %v877 = vpack.c.b16 %v838, %v837
      %v878 = vpack.c.b16 %v840, %v839
      %v879 = vpack.c.b16 %v842, %v841
      %v880 = vpack.c.b16 %v844, %v843
      %v881 = vpack.c.b16 %v846, %v845
      %v882 = vpack.c.b16 %v848, %v847
      %v883 = vpack.c.b16 %v850, %v849
      %v884 = vpack.c.b16 %v852, %v851
      %v885 = vpack.c.b16 %v854, %v853
      %v886 = vpack.c.b16 %v856, %v855
      %v887 = vpack.c.b16 %v858, %v857
      %v888 = vpack.c.b16 %v860, %v859
      %v889 = vpack.c.b16 %v862, %v861
      %v890 = vpack.c.b16 %v864, %v863
      %v891 = vpack.c.b16 %v866, %v865
      %v892 = vpack.c.b16 %v868, %v867
      %917 = vmatprep.subr.bf16.mxu0 0
      %918 = vmatpush1.bf16.msra.mxu0 %v876
      %919 = vmatprep.subr.bf16.mxu0 0
      %920 = vmatpush1.bf16.msra.mxu0 %v875
      %921 = vmatprep.subr.bf16.mxu0 0
      %922 = vmatpush1.bf16.msra.mxu0 %v874
      %923 = vmatprep.subr.bf16.mxu0 0
      %924 = vmatpush1.bf16.msra.mxu0 %v873
      %925 = vmatprep.subr.bf16.mxu0 0
      %926 = vmatpush1.bf16.msra.mxu0 %v872
      %927 = vmatprep.subr.bf16.mxu0 0
      %928 = vmatpush1.bf16.msra.mxu0 %v871
      %929 = vmatprep.subr.bf16.mxu0 0
      %930 = vmatpush1.bf16.msra.mxu0 %v870
      %931 = vmatprep.subr.bf16.mxu0 0
      %932 = vmatpush1.bf16.msra.mxu0 %v869
      %933 = vmatprep.subr.bf16.mxu0 0
      %934 = vmatpush2.bf16.msra.mxu0 %v884
      %935 = vmatprep.subr.bf16.mxu0 0
      %936 = vmatpush2.bf16.msra.mxu0 %v883
      %937 = vmatprep.subr.bf16.mxu0 0
      %938 = vmatpush2.bf16.msra.mxu0 %v882
      %939 = vmatprep.subr.bf16.mxu0 0
      %940 = vmatpush2.bf16.msra.mxu0 %v881
      %941 = vmatprep.subr.bf16.mxu0 0
      %942 = vmatpush2.bf16.msra.mxu0 %v880
      %943 = vmatprep.subr.bf16.mxu0 0
      %944 = vmatpush2.bf16.msra.mxu0 %v879
      %945 = vmatprep.subr.bf16.mxu0 0
      %946 = vmatpush2.bf16.msra.mxu0 %v878
      %947 = vmatprep.subr.bf16.mxu0 0
      %948 = vmatpush2.bf16.msra.mxu0 %v877
      %949 = vmatprep.mubr.bf16.mxu0 %v750
      %950 = vmatmul.mubr.bf16.gmra.mxu0 %v749
      %v951 = vpop.f32.mrf.mxu0
      %v952 = vadd.f32 0.0, %v951
      %v953 = vpop.f32.mrf.mxu0
      %v954 = vpop.f32.mrf.mxu0
      %v955 = vadd.f32 0.0, %v954
      %v956 = vpop.f32.mrf.mxu0
      %957 = vmatprep.mubr.bf16.mxu0 %v753
      %958 = vmatmul.mubr.bf16.gmra.mxu0 %v752
      %v959 = vpop.f32.mrf.mxu0
      %v960 = vadd.f32 0.0, %v959
      %v961 = vpop.f32.mrf.mxu0
      %v962 = vpop.f32.mrf.mxu0
      %v963 = vadd.f32 0.0, %v962
      %v964 = vpop.f32.mrf.mxu0
      %965 = vmatprep.mubr.bf16.mxu0 %v756
      %966 = vmatmul.mubr.bf16.gmra.mxu0 %v755
      %v967 = vpop.f32.mrf.mxu0
      %v968 = vadd.f32 0.0, %v967
      %v969 = vpop.f32.mrf.mxu0
      %v970 = vpop.f32.mrf.mxu0
      %v971 = vadd.f32 0.0, %v970
      %v972 = vpop.f32.mrf.mxu0
      %973 = vmatprep.mubr.bf16.mxu0 %v759
      %974 = vmatmul.mubr.bf16.gmra.mxu0 %v758
      %v975 = vpop.f32.mrf.mxu0
      %v976 = vadd.f32 0.0, %v975
      %v977 = vpop.f32.mrf.mxu0
      %v978 = vpop.f32.mrf.mxu0
      %v979 = vadd.f32 0.0, %v978
      %v980 = vpop.f32.mrf.mxu0
      %981 = vdwg.mxu0
      %982 = vmatprep.subr.bf16.mxu0 0
      %983 = vmatpush1.bf16.msra.mxu0 %v892
      %984 = vmatprep.subr.bf16.mxu0 0
      %985 = vmatpush1.bf16.msra.mxu0 %v891
      %986 = vmatprep.subr.bf16.mxu0 0
      %987 = vmatpush1.bf16.msra.mxu0 %v890
      %988 = vmatprep.subr.bf16.mxu0 0
      %989 = vmatpush1.bf16.msra.mxu0 %v889
      %990 = vmatprep.subr.bf16.mxu0 0
      %991 = vmatpush1.bf16.msra.mxu0 %v888
      %992 = vmatprep.subr.bf16.mxu0 0
      %993 = vmatpush1.bf16.msra.mxu0 %v887
      %994 = vmatprep.subr.bf16.mxu0 0
      %995 = vmatpush1.bf16.msra.mxu0 %v886
      %996 = vmatprep.subr.bf16.mxu0 0
      %997 = vmatpush1.bf16.msra.mxu0 %v885
      %998 = vmatprep.subr.bf16.mxu0 0
      %999 = vmatpush2.bf16.msra.mxu0 0
      %1000 = vmatprep.subr.bf16.mxu0 0
      %1001 = vmatpush2.bf16.msra.mxu0 0
      %1002 = vmatprep.subr.bf16.mxu0 0
      %1003 = vmatpush2.bf16.msra.mxu0 0
      %1004 = vmatprep.subr.bf16.mxu0 0
      %1005 = vmatpush2.bf16.msra.mxu0 0
      %1006 = vmatprep.subr.bf16.mxu0 0
      %1007 = vmatpush2.bf16.msra.mxu0 0
      %1008 = vmatprep.subr.bf16.mxu0 0
      %1009 = vmatpush2.bf16.msra.mxu0 0
      %1010 = vmatprep.subr.bf16.mxu0 0
      %1011 = vmatpush2.bf16.msra.mxu0 0
      %1012 = vmatprep.subr.bf16.mxu0 0
      %1013 = vmatpush2.bf16.msra.mxu0 0
      %1014 = vmatprep.mubr.bf16.mxu0 0
      %1015 = vmatmul.mubr.bf16.gmra.mxu0 %v751
      %v1016 = vpop.f32.mrf.mxu0
      %v1017 = vadd.f32 %v952, %v1016
      %v1018 = vpop.f32.mrf.mxu0
      %v1019 = vpop.f32.mrf.mxu0
      %v1020 = vadd.f32 %v955, %v1019
      %v1021 = vpop.f32.mrf.mxu0
      %1022 = vmatprep.mubr.bf16.mxu0 0
      %1023 = vmatmul.mubr.bf16.gmra.mxu0 %v754
      %v1024 = vpop.f32.mrf.mxu0
      %v1025 = vadd.f32 %v960, %v1024
      %v1026 = vpop.f32.mrf.mxu0
      %v1027 = vpop.f32.mrf.mxu0
      %v1028 = vadd.f32 %v963, %v1027
      %v1029 = vpop.f32.mrf.mxu0
      %1030 = vmatprep.mubr.bf16.mxu0 0
      %1031 = vmatmul.mubr.bf16.gmra.mxu0 %v757
      %v1032 = vpop.f32.mrf.mxu0
      %v1033 = vadd.f32 %v968, %v1032
      %v1034 = vpop.f32.mrf.mxu0
      %v1035 = vpop.f32.mrf.mxu0
      %v1036 = vadd.f32 %v971, %v1035
      %v1037 = vpop.f32.mrf.mxu0
      %1038 = vmatprep.mubr.bf16.mxu0 0
      %1039 = vmatmul.mubr.bf16.gmra.mxu0 %v760
      %v1040 = vpop.f32.mrf.mxu0
      %v1041 = vadd.f32 %v976, %v1040
      %v1042 = vpop.f32.mrf.mxu0
      %v1043 = vpop.f32.mrf.mxu0
      %v1044 = vadd.f32 %v979, %v1043
      %v1045 = vpop.f32.mrf.mxu0
      %1046 = vdwg.mxu0
      %v1047 = vpack.c.b16 %v430, %v428
      %v1048 = vpack.c.b16 %v518, %v516
      %v1049 = vpack.c.b16 %v519, %v517
      %v1050 = vpack.c.b16 %v434, %v432
      %v1051 = vpack.c.b16 %v522, %v520
      %v1052 = vpack.c.b16 %v523, %v521
      %v1053 = vpack.c.b16 %v438, %v436
      %v1054 = vpack.c.b16 %v526, %v524
      %v1055 = vpack.c.b16 %v527, %v525
      %v1056 = vpack.c.b16 %v442, %v440
      %v1057 = vpack.c.b16 %v530, %v528
      %v1058 = vpack.c.b16 %v531, %v529
      %v1119 = vunpack.c.l.b16 %v532
      %v1120 = vunpack.c.l.b16 %v533
      %v1121 = vunpack.c.l.b16 %v534
      %v1122 = vunpack.c.l.b16 %v535
      %v1123 = vunpack.c.l.b16 %v536
      %v1124 = vunpack.c.l.b16 %v537
      %v1125 = vunpack.c.l.b16 %v538
      %v1126 = vunpack.c.l.b16 %v539
      %v1127 = vunpack.c.l.b16 %v540
      %v1128 = vunpack.c.l.b16 %v541
      %v1129 = vunpack.c.l.b16 %v542
      %v1130 = vunpack.c.l.b16 %v543
      %v1131 = vunpack.c.l.b16 %v544
      %v1132 = vunpack.c.l.b16 %v545
      %v1133 = vunpack.c.l.b16 %v546
      %v1134 = vunpack.c.l.b16 %v547
      %v1135 = vunpack.c.l.b16 %v548
      %v1136 = vunpack.c.l.b16 %v549
      %v1137 = vunpack.c.l.b16 %v550
      %v1138 = vunpack.c.l.b16 %v551
      %v1139 = vunpack.c.l.b16 %v552
      %v1140 = vunpack.c.l.b16 %v553
      %v1141 = vunpack.c.l.b16 %v554
      %v1142 = vunpack.c.l.b16 %v555
      %v1143 = vunpack.c.l.b16 %v556
      %v1144 = vunpack.c.l.b16 %v557
      %v1145 = vunpack.c.l.b16 %v558
      %v1146 = vunpack.c.l.b16 %v559
      %v1147 = vunpack.c.l.b16 %v560
      %v1148 = vunpack.c.l.b16 %v561
      %v1149 = vunpack.c.l.b16 %v562
      %v1150 = vunpack.c.l.b16 %v563
      %v1151 = vunpack.c.l.b16 %v564
      %v1152 = vunpack.c.l.b16 %v565
      %v1153 = vunpack.c.l.b16 %v566
      %v1154 = vunpack.c.l.b16 %v567
      %v1155 = vunpack.c.l.b16 %v568
      %v1156 = vunpack.c.l.b16 %v569
      %v1157 = vunpack.c.l.b16 %v570
      %v1158 = vunpack.c.l.b16 %v571
      %v1159 = vunpack.c.l.b16 %v572
      %v1160 = vunpack.c.l.b16 %v573
      %v1161 = vunpack.c.l.b16 %v574
      %v1162 = vunpack.c.l.b16 %v575
      %v1163 = vunpack.c.l.b16 %v576
      %v1164 = vunpack.c.l.b16 %v577
      %v1165 = vunpack.c.l.b16 %v578
      %v1166 = vunpack.c.l.b16 %v579
      %v1167 = vpack.c.b16 %v1120, %v1119
      %v1168 = vpack.c.b16 %v1122, %v1121
      %v1169 = vpack.c.b16 %v1124, %v1123
      %v1170 = vpack.c.b16 %v1126, %v1125
      %v1171 = vpack.c.b16 %v1128, %v1127
      %v1172 = vpack.c.b16 %v1130, %v1129
      %v1173 = vpack.c.b16 %v1132, %v1131
      %v1174 = vpack.c.b16 %v1134, %v1133
      %v1175 = vpack.c.b16 %v1136, %v1135
      %v1176 = vpack.c.b16 %v1138, %v1137
      %v1177 = vpack.c.b16 %v1140, %v1139
      %v1178 = vpack.c.b16 %v1142, %v1141
      %v1179 = vpack.c.b16 %v1144, %v1143
      %v1180 = vpack.c.b16 %v1146, %v1145
      %v1181 = vpack.c.b16 %v1148, %v1147
      %v1182 = vpack.c.b16 %v1150, %v1149
      %v1183 = vpack.c.b16 %v1152, %v1151
      %v1184 = vpack.c.b16 %v1154, %v1153
      %v1185 = vpack.c.b16 %v1156, %v1155
      %v1186 = vpack.c.b16 %v1158, %v1157
      %v1187 = vpack.c.b16 %v1160, %v1159
      %v1188 = vpack.c.b16 %v1162, %v1161
      %v1189 = vpack.c.b16 %v1164, %v1163
      %v1190 = vpack.c.b16 %v1166, %v1165
      %1215 = vmatprep.subr.bf16.mxu0 0
      %1216 = vmatpush1.bf16.msra.mxu0 %v1174
      %1217 = vmatprep.subr.bf16.mxu0 0
      %1218 = vmatpush1.bf16.msra.mxu0 %v1173
      %1219 = vmatprep.subr.bf16.mxu0 0
      %1220 = vmatpush1.bf16.msra.mxu0 %v1172
      %1221 = vmatprep.subr.bf16.mxu0 0
      %1222 = vmatpush1.bf16.msra.mxu0 %v1171
      %1223 = vmatprep.subr.bf16.mxu0 0
      %1224 = vmatpush1.bf16.msra.mxu0 %v1170
      %1225 = vmatprep.subr.bf16.mxu0 0
      %1226 = vmatpush1.bf16.msra.mxu0 %v1169
      %1227 = vmatprep.subr.bf16.mxu0 0
      %1228 = vmatpush1.bf16.msra.mxu0 %v1168
      %1229 = vmatprep.subr.bf16.mxu0 0
      %1230 = vmatpush1.bf16.msra.mxu0 %v1167
      %1231 = vmatprep.subr.bf16.mxu0 0
      %1232 = vmatpush2.bf16.msra.mxu0 %v1182
      %1233 = vmatprep.subr.bf16.mxu0 0
      %1234 = vmatpush2.bf16.msra.mxu0 %v1181
      %1235 = vmatprep.subr.bf16.mxu0 0
      %1236 = vmatpush2.bf16.msra.mxu0 %v1180
      %1237 = vmatprep.subr.bf16.mxu0 0
      %1238 = vmatpush2.bf16.msra.mxu0 %v1179
      %1239 = vmatprep.subr.bf16.mxu0 0
      %1240 = vmatpush2.bf16.msra.mxu0 %v1178
      %1241 = vmatprep.subr.bf16.mxu0 0
      %1242 = vmatpush2.bf16.msra.mxu0 %v1177
      %1243 = vmatprep.subr.bf16.mxu0 0
      %1244 = vmatpush2.bf16.msra.mxu0 %v1176
      %1245 = vmatprep.subr.bf16.mxu0 0
      %1246 = vmatpush2.bf16.msra.mxu0 %v1175
      %1247 = vmatprep.mubr.bf16.mxu0 %v1048
      %1248 = vmatmul.mubr.bf16.gmra.mxu0 %v1047
      %v1249 = vpop.f32.mrf.mxu0
      %v1250 = vadd.f32 %v1017, %v1249
      %v1251 = vpop.f32.mrf.mxu0
      %v1252 = vpop.f32.mrf.mxu0
      %v1253 = vadd.f32 %v1020, %v1252
      %v1254 = vpop.f32.mrf.mxu0
      %1255 = vmatprep.mubr.bf16.mxu0 %v1051
      %1256 = vmatmul.mubr.bf16.gmra.mxu0 %v1050
      %v1257 = vpop.f32.mrf.mxu0
      %v1258 = vadd.f32 %v1025, %v1257
      %v1259 = vpop.f32.mrf.mxu0
      %v1260 = vpop.f32.mrf.mxu0
      %v1261 = vadd.f32 %v1028, %v1260
      %v1262 = vpop.f32.mrf.mxu0
      %1263 = vmatprep.mubr.bf16.mxu0 %v1054
      %1264 = vmatmul.mubr.bf16.gmra.mxu0 %v1053
      %v1265 = vpop.f32.mrf.mxu0
      %v1266 = vadd.f32 %v1033, %v1265
      %v1267 = vpop.f32.mrf.mxu0
      %v1268 = vpop.f32.mrf.mxu0
      %v1269 = vadd.f32 %v1036, %v1268
      %v1270 = vpop.f32.mrf.mxu0
      %1271 = vmatprep.mubr.bf16.mxu0 %v1057
      %1272 = vmatmul.mubr.bf16.gmra.mxu0 %v1056
      %v1273 = vpop.f32.mrf.mxu0
      %v1274 = vadd.f32 %v1041, %v1273
      %v1275 = vpop.f32.mrf.mxu0
      %v1276 = vpop.f32.mrf.mxu0
      %v1277 = vadd.f32 %v1044, %v1276
      %v1278 = vpop.f32.mrf.mxu0
      %1279 = vdwg.mxu0
      %1280 = vmatprep.subr.bf16.mxu0 0
      %1281 = vmatpush1.bf16.msra.mxu0 %v1190
      %1282 = vmatprep.subr.bf16.mxu0 0
      %1283 = vmatpush1.bf16.msra.mxu0 %v1189
      %1284 = vmatprep.subr.bf16.mxu0 0
      %1285 = vmatpush1.bf16.msra.mxu0 %v1188
      %1286 = vmatprep.subr.bf16.mxu0 0
      %1287 = vmatpush1.bf16.msra.mxu0 %v1187
      %1288 = vmatprep.subr.bf16.mxu0 0
      %1289 = vmatpush1.bf16.msra.mxu0 %v1186
      %1290 = vmatprep.subr.bf16.mxu0 0
      %1291 = vmatpush1.bf16.msra.mxu0 %v1185
      %1292 = vmatprep.subr.bf16.mxu0 0
      %1293 = vmatpush1.bf16.msra.mxu0 %v1184
      %1294 = vmatprep.subr.bf16.mxu0 0
      %1295 = vmatpush1.bf16.msra.mxu0 %v1183
      %1296 = vmatprep.subr.bf16.mxu0 0
      %1297 = vmatpush2.bf16.msra.mxu0 0
      %1298 = vmatprep.subr.bf16.mxu0 0
      %1299 = vmatpush2.bf16.msra.mxu0 0
      %1300 = vmatprep.subr.bf16.mxu0 0
      %1301 = vmatpush2.bf16.msra.mxu0 0
      %1302 = vmatprep.subr.bf16.mxu0 0
      %1303 = vmatpush2.bf16.msra.mxu0 0
      %1304 = vmatprep.subr.bf16.mxu0 0
      %1305 = vmatpush2.bf16.msra.mxu0 0
      %1306 = vmatprep.subr.bf16.mxu0 0
      %1307 = vmatpush2.bf16.msra.mxu0 0
      %1308 = vmatprep.subr.bf16.mxu0 0
      %1309 = vmatpush2.bf16.msra.mxu0 0
      %1310 = vmatprep.subr.bf16.mxu0 0
      %1311 = vmatpush2.bf16.msra.mxu0 0
      %1312 = vmatprep.mubr.bf16.mxu0 0
      %1313 = vmatmul.mubr.bf16.gmra.mxu0 %v1049
      %v1314 = vpop.f32.mrf.mxu0
      %v1315 = vadd.f32 %v1250, %v1314
      %v1316 = vpop.f32.mrf.mxu0
      %v1317 = vpop.f32.mrf.mxu0
      %v1318 = vadd.f32 %v1253, %v1317
      %v1319 = vpop.f32.mrf.mxu0
      %1320 = vmatprep.mubr.bf16.mxu0 0
      %1321 = vmatmul.mubr.bf16.gmra.mxu0 %v1052
      %v1322 = vpop.f32.mrf.mxu0
      %v1323 = vadd.f32 %v1258, %v1322
      %v1324 = vpop.f32.mrf.mxu0
      %v1325 = vpop.f32.mrf.mxu0
      %v1326 = vadd.f32 %v1261, %v1325
      %v1327 = vpop.f32.mrf.mxu0
      %1328 = vmatprep.mubr.bf16.mxu0 0
      %1329 = vmatmul.mubr.bf16.gmra.mxu0 %v1055
      %v1330 = vpop.f32.mrf.mxu0
      %v1331 = vadd.f32 %v1266, %v1330
      %v1332 = vpop.f32.mrf.mxu0
      %v1333 = vpop.f32.mrf.mxu0
      %v1334 = vadd.f32 %v1269, %v1333
      %v1335 = vpop.f32.mrf.mxu0
      %1336 = vmatprep.mubr.bf16.mxu0 0
      %1337 = vmatmul.mubr.bf16.gmra.mxu0 %v1058
      %v1338 = vpop.f32.mrf.mxu0
      %v1339 = vadd.f32 %v1274, %v1338
      %v1340 = vpop.f32.mrf.mxu0
      %v1341 = vpop.f32.mrf.mxu0
      %v1342 = vadd.f32 %v1277, %v1341
      %v1343 = vpop.f32.mrf.mxu0
      %1344 = vdwg.mxu0
      %v1347 = vunpack.c.l.b16 %v377
      %v1348 = vunpack.c.l.b16 %v378
      %v1349 = vpack.c.b16 %v1348, %v1347
      %v1351 = vshrl.u32 %v1349, 16
      %v1353 = vshll.u32 %v1349, 16
      %v1355 = vrot.slane %v1353, 1
      %v1356 = vor.u32 %v1351, %v1355
      %v1358 = vunpack.c.l.b16 %v387
      %v1359 = vunpack.c.l.b16 %v1356
      %s1360 = scalar_lea.vmem %s1, 384
      %v1361 = vld [vmem:[%s1360] sm:$0xf]
      %v1362 = vld [vmem:[%s1360 + $0x4] sm:$0xf]
      %v1363 = vld [vmem:[%s1360 + $0x8] sm:$0xf]
      %v1364 = vld [vmem:[%s1360 + $0xc] sm:$0xf]
      %v1365 = vld [vmem:[%s1360 + $0x10] sm:$0xf]
      %v1366 = vld [vmem:[%s1360 + $0x14] sm:$0xf]
      %v1367 = vld [vmem:[%s1360 + $0x18] sm:$0xf]
      %v1368 = vld [vmem:[%s1360 + $0x1c] sm:$0xf]
      %v1369 = vld [vmem:[%s1360 + $0x20] sm:$0xf]
      %v1370 = vld [vmem:[%s1360 + $0x24] sm:$0xf]
      %v1371 = vld [vmem:[%s1360 + $0x28] sm:$0xf]
      %v1372 = vld [vmem:[%s1360 + $0x2c] sm:$0xf]
      %v1373 = vld [vmem:[%s1360 + $0x30] sm:$0xf]
      %v1374 = vld [vmem:[%s1360 + $0x34] sm:$0xf]
      %v1375 = vld [vmem:[%s1360 + $0x38] sm:$0xf]
      %v1376 = vld [vmem:[%s1360 + $0x3c] sm:$0xf]
      %v1377 = vld [vmem:[%s1360 + $0x40] sm:$0xf]
      %v1378 = vld [vmem:[%s1360 + $0x44] sm:$0xf]
      %v1379 = vld [vmem:[%s1360 + $0x48] sm:$0xf]
      %v1380 = vld [vmem:[%s1360 + $0x4c] sm:$0xf]
      %v1381 = vld [vmem:[%s1360 + $0x50] sm:$0xf]
      %v1382 = vld [vmem:[%s1360 + $0x54] sm:$0xf]
      %v1383 = vld [vmem:[%s1360 + $0x58] sm:$0xf]
      %v1384 = vld [vmem:[%s1360 + $0x5c] sm:$0xf]
      %v1385 = vld [vmem:[%s1360 + $0x60] sm:$0xf]
      %v1386 = vld [vmem:[%s1360 + $0x64] sm:$0xf]
      %v1387 = vld [vmem:[%s1360 + $0x68] sm:$0xf]
      %v1388 = vld [vmem:[%s1360 + $0x6c] sm:$0xf]
      %v1389 = vld [vmem:[%s1360 + $0x70] sm:$0xf]
      %v1390 = vld [vmem:[%s1360 + $0x74] sm:$0xf]
      %v1391 = vld [vmem:[%s1360 + $0x78] sm:$0xf]
      %v1392 = vld [vmem:[%s1360 + $0x7c] sm:$0xf]
      %v1393 = vld [vmem:[%s1360 + $0x80] sm:$0xf]
      %v1394 = vld [vmem:[%s1360 + $0x84] sm:$0xf]
      %v1395 = vld [vmem:[%s1360 + $0x88] sm:$0xf]
      %v1396 = vld [vmem:[%s1360 + $0x8c] sm:$0xf]
      %v1397 = vld [vmem:[%s1360 + $0x90] sm:$0xf]
      %v1398 = vld [vmem:[%s1360 + $0x94] sm:$0xf]
      %v1399 = vld [vmem:[%s1360 + $0x98] sm:$0xf]
      %v1400 = vld [vmem:[%s1360 + $0x9c] sm:$0xf]
      %v1401 = vld [vmem:[%s1360 + $0xa0] sm:$0xf]
      %v1402 = vld [vmem:[%s1360 + $0xa4] sm:$0xf]
      %v1403 = vld [vmem:[%s1360 + $0xa8] sm:$0xf]
      %v1404 = vld [vmem:[%s1360 + $0xac] sm:$0xf]
      %v1405 = vld [vmem:[%s1360 + $0xb0] sm:$0xf]
      %v1406 = vld [vmem:[%s1360 + $0xb4] sm:$0xf]
      %v1407 = vld [vmem:[%s1360 + $0xb8] sm:$0xf]
      %v1408 = vld [vmem:[%s1360 + $0xbc] sm:$0xf]
      %v1409 = vpack.c.b16 %v432, %v430
      %v1410 = vpack.c.b16 %v520, %v518
      %v1411 = vpack.c.b16 %v521, %v519
      %v1412 = vpack.c.b16 %v436, %v434
      %v1413 = vpack.c.b16 %v524, %v522
      %v1414 = vpack.c.b16 %v525, %v523
      %v1415 = vpack.c.b16 %v440, %v438
      %v1416 = vpack.c.b16 %v528, %v526
      %v1417 = vpack.c.b16 %v529, %v527
      %v1418 = vpack.c.b16 %v1347, %v442
      %v1419 = vpack.c.b16 %v1358, %v530
      %v1420 = vpack.c.b16 %v1359, %v531
      %v1481 = vunpack.c.l.b16 %v1361
      %v1482 = vunpack.c.l.b16 %v1362
      %v1483 = vunpack.c.l.b16 %v1363
      %v1484 = vunpack.c.l.b16 %v1364
      %v1485 = vunpack.c.l.b16 %v1365
      %v1486 = vunpack.c.l.b16 %v1366
      %v1487 = vunpack.c.l.b16 %v1367
      %v1488 = vunpack.c.l.b16 %v1368
      %v1489 = vunpack.c.l.b16 %v1369
      %v1490 = vunpack.c.l.b16 %v1370
      %v1491 = vunpack.c.l.b16 %v1371
      %v1492 = vunpack.c.l.b16 %v1372
      %v1493 = vunpack.c.l.b16 %v1373
      %v1494 = vunpack.c.l.b16 %v1374
      %v1495 = vunpack.c.l.b16 %v1375
      %v1496 = vunpack.c.l.b16 %v1376
      %v1497 = vunpack.c.l.b16 %v1377
      %v1498 = vunpack.c.l.b16 %v1378
      %v1499 = vunpack.c.l.b16 %v1379
      %v1500 = vunpack.c.l.b16 %v1380
      %v1501 = vunpack.c.l.b16 %v1381
      %v1502 = vunpack.c.l.b16 %v1382
      %v1503 = vunpack.c.l.b16 %v1383
      %v1504 = vunpack.c.l.b16 %v1384
      %v1505 = vunpack.c.l.b16 %v1385
      %v1506 = vunpack.c.l.b16 %v1386
      %v1507 = vunpack.c.l.b16 %v1387
      %v1508 = vunpack.c.l.b16 %v1388
      %v1509 = vunpack.c.l.b16 %v1389
      %v1510 = vunpack.c.l.b16 %v1390
      %v1511 = vunpack.c.l.b16 %v1391
      %v1512 = vunpack.c.l.b16 %v1392
      %v1513 = vunpack.c.l.b16 %v1393
      %v1514 = vunpack.c.l.b16 %v1394
      %v1515 = vunpack.c.l.b16 %v1395
      %v1516 = vunpack.c.l.b16 %v1396
      %v1517 = vunpack.c.l.b16 %v1397
      %v1518 = vunpack.c.l.b16 %v1398
      %v1519 = vunpack.c.l.b16 %v1399
      %v1520 = vunpack.c.l.b16 %v1400
      %v1521 = vunpack.c.l.b16 %v1401
      %v1522 = vunpack.c.l.b16 %v1402
      %v1523 = vunpack.c.l.b16 %v1403
      %v1524 = vunpack.c.l.b16 %v1404
      %v1525 = vunpack.c.l.b16 %v1405
      %v1526 = vunpack.c.l.b16 %v1406
      %v1527 = vunpack.c.l.b16 %v1407
      %v1528 = vunpack.c.l.b16 %v1408
      %v1529 = vpack.c.b16 %v1482, %v1481
      %v1530 = vpack.c.b16 %v1484, %v1483
      %v1531 = vpack.c.b16 %v1486, %v1485
      %v1532 = vpack.c.b16 %v1488, %v1487
      %v1533 = vpack.c.b16 %v1490, %v1489
      %v1534 = vpack.c.b16 %v1492, %v1491
      %v1535 = vpack.c.b16 %v1494, %v1493
      %v1536 = vpack.c.b16 %v1496, %v1495
      %v1537 = vpack.c.b16 %v1498, %v1497
      %v1538 = vpack.c.b16 %v1500, %v1499
      %v1539 = vpack.c.b16 %v1502, %v1501
      %v1540 = vpack.c.b16 %v1504, %v1503
      %v1541 = vpack.c.b16 %v1506, %v1505
      %v1542 = vpack.c.b16 %v1508, %v1507
      %v1543 = vpack.c.b16 %v1510, %v1509
      %v1544 = vpack.c.b16 %v1512, %v1511
      %v1545 = vpack.c.b16 %v1514, %v1513
      %v1546 = vpack.c.b16 %v1516, %v1515
      %v1547 = vpack.c.b16 %v1518, %v1517
      %v1548 = vpack.c.b16 %v1520, %v1519
      %v1549 = vpack.c.b16 %v1522, %v1521
      %v1550 = vpack.c.b16 %v1524, %v1523
      %v1551 = vpack.c.b16 %v1526, %v1525
      %v1552 = vpack.c.b16 %v1528, %v1527
      %1577 = vmatprep.subr.bf16.mxu0 0
      %1578 = vmatpush1.bf16.msra.mxu0 %v1536
      %1579 = vmatprep.subr.bf16.mxu0 0
      %1580 = vmatpush1.bf16.msra.mxu0 %v1535
      %1581 = vmatprep.subr.bf16.mxu0 0
      %1582 = vmatpush1.bf16.msra.mxu0 %v1534
      %1583 = vmatprep.subr.bf16.mxu0 0
      %1584 = vmatpush1.bf16.msra.mxu0 %v1533
      %1585 = vmatprep.subr.bf16.mxu0 0
      %1586 = vmatpush1.bf16.msra.mxu0 %v1532
      %1587 = vmatprep.subr.bf16.mxu0 0
      %1588 = vmatpush1.bf16.msra.mxu0 %v1531
      %1589 = vmatprep.subr.bf16.mxu0 0
      %1590 = vmatpush1.bf16.msra.mxu0 %v1530
      %1591 = vmatprep.subr.bf16.mxu0 0
      %1592 = vmatpush1.bf16.msra.mxu0 %v1529
      %1593 = vmatprep.subr.bf16.mxu0 0
      %1594 = vmatpush2.bf16.msra.mxu0 %v1544
      %1595 = vmatprep.subr.bf16.mxu0 0
      %1596 = vmatpush2.bf16.msra.mxu0 %v1543
      %1597 = vmatprep.subr.bf16.mxu0 0
      %1598 = vmatpush2.bf16.msra.mxu0 %v1542
      %1599 = vmatprep.subr.bf16.mxu0 0
      %1600 = vmatpush2.bf16.msra.mxu0 %v1541
      %1601 = vmatprep.subr.bf16.mxu0 0
      %1602 = vmatpush2.bf16.msra.mxu0 %v1540
      %1603 = vmatprep.subr.bf16.mxu0 0
      %1604 = vmatpush2.bf16.msra.mxu0 %v1539
      %1605 = vmatprep.subr.bf16.mxu0 0
      %1606 = vmatpush2.bf16.msra.mxu0 %v1538
      %1607 = vmatprep.subr.bf16.mxu0 0
      %1608 = vmatpush2.bf16.msra.mxu0 %v1537
      %1609 = vmatprep.mubr.bf16.mxu0 %v1410
      %1610 = vmatmul.mubr.bf16.gmra.mxu0 %v1409
      %v1611 = vpop.f32.mrf.mxu0
      %v1612 = vadd.f32 0.0, %v1611
      %v1613 = vpop.f32.mrf.mxu0
      %v1614 = vpop.f32.mrf.mxu0
      %v1615 = vadd.f32 0.0, %v1614
      %v1616 = vpop.f32.mrf.mxu0
      %1617 = vmatprep.mubr.bf16.mxu0 %v1413
      %1618 = vmatmul.mubr.bf16.gmra.mxu0 %v1412
      %v1619 = vpop.f32.mrf.mxu0
      %v1620 = vadd.f32 0.0, %v1619
      %v1621 = vpop.f32.mrf.mxu0
      %v1622 = vpop.f32.mrf.mxu0
      %v1623 = vadd.f32 0.0, %v1622
      %v1624 = vpop.f32.mrf.mxu0
      %1625 = vmatprep.mubr.bf16.mxu0 %v1416
      %1626 = vmatmul.mubr.bf16.gmra.mxu0 %v1415
      %v1627 = vpop.f32.mrf.mxu0
      %v1628 = vadd.f32 0.0, %v1627
      %v1629 = vpop.f32.mrf.mxu0
      %v1630 = vpop.f32.mrf.mxu0
      %v1631 = vadd.f32 0.0, %v1630
      %v1632 = vpop.f32.mrf.mxu0
      %1633 = vmatprep.mubr.bf16.mxu0 %v1419
      %1634 = vmatmul.mubr.bf16.gmra.mxu0 %v1418
      %v1635 = vpop.f32.mrf.mxu0
      %v1636 = vadd.f32 0.0, %v1635
      %v1637 = vpop.f32.mrf.mxu0
      %v1638 = vpop.f32.mrf.mxu0
      %v1639 = vadd.f32 0.0, %v1638
      %v1640 = vpop.f32.mrf.mxu0
      %1641 = vdwg.mxu0
      %1642 = vmatprep.subr.bf16.mxu0 0
      %1643 = vmatpush1.bf16.msra.mxu0 %v1552
      %1644 = vmatprep.subr.bf16.mxu0 0
      %1645 = vmatpush1.bf16.msra.mxu0 %v1551
      %1646 = vmatprep.subr.bf16.mxu0 0
      %1647 = vmatpush1.bf16.msra.mxu0 %v1550
      %1648 = vmatprep.subr.bf16.mxu0 0
      %1649 = vmatpush1.bf16.msra.mxu0 %v1549
      %1650 = vmatprep.subr.bf16.mxu0 0
      %1651 = vmatpush1.bf16.msra.mxu0 %v1548
      %1652 = vmatprep.subr.bf16.mxu0 0
      %1653 = vmatpush1.bf16.msra.mxu0 %v1547
      %1654 = vmatprep.subr.bf16.mxu0 0
      %1655 = vmatpush1.bf16.msra.mxu0 %v1546
      %1656 = vmatprep.subr.bf16.mxu0 0
      %1657 = vmatpush1.bf16.msra.mxu0 %v1545
      %1658 = vmatprep.subr.bf16.mxu0 0
      %1659 = vmatpush2.bf16.msra.mxu0 0
      %1660 = vmatprep.subr.bf16.mxu0 0
      %1661 = vmatpush2.bf16.msra.mxu0 0
      %1662 = vmatprep.subr.bf16.mxu0 0
      %1663 = vmatpush2.bf16.msra.mxu0 0
      %1664 = vmatprep.subr.bf16.mxu0 0
      %1665 = vmatpush2.bf16.msra.mxu0 0
      %1666 = vmatprep.subr.bf16.mxu0 0
      %1667 = vmatpush2.bf16.msra.mxu0 0
      %1668 = vmatprep.subr.bf16.mxu0 0
      %1669 = vmatpush2.bf16.msra.mxu0 0
      %1670 = vmatprep.subr.bf16.mxu0 0
      %1671 = vmatpush2.bf16.msra.mxu0 0
      %1672 = vmatprep.subr.bf16.mxu0 0
      %1673 = vmatpush2.bf16.msra.mxu0 0
      %1674 = vmatprep.mubr.bf16.mxu0 0
      %1675 = vmatmul.mubr.bf16.gmra.mxu0 %v1411
      %v1676 = vpop.f32.mrf.mxu0
      %v1677 = vadd.f32 %v1612, %v1676
      %v1678 = vpop.f32.mrf.mxu0
      %v1679 = vpop.f32.mrf.mxu0
      %v1680 = vadd.f32 %v1615, %v1679
      %v1681 = vpop.f32.mrf.mxu0
      %1682 = vmatprep.mubr.bf16.mxu0 0
      %1683 = vmatmul.mubr.bf16.gmra.mxu0 %v1414
      %v1684 = vpop.f32.mrf.mxu0
      %v1685 = vadd.f32 %v1620, %v1684
      %v1686 = vpop.f32.mrf.mxu0
      %v1687 = vpop.f32.mrf.mxu0
      %v1688 = vadd.f32 %v1623, %v1687
      %v1689 = vpop.f32.mrf.mxu0
      %1690 = vmatprep.mubr.bf16.mxu0 0
      %1691 = vmatmul.mubr.bf16.gmra.mxu0 %v1417
      %v1692 = vpop.f32.mrf.mxu0
      %v1693 = vadd.f32 %v1628, %v1692
      %v1694 = vpop.f32.mrf.mxu0
      %v1695 = vpop.f32.mrf.mxu0
      %v1696 = vadd.f32 %v1631, %v1695
      %v1697 = vpop.f32.mrf.mxu0
      %1698 = vmatprep.mubr.bf16.mxu0 0
      %1699 = vmatmul.mubr.bf16.gmra.mxu0 %v1420
      %v1700 = vpop.f32.mrf.mxu0
      %v1701 = vadd.f32 %v1636, %v1700
      %v1702 = vpop.f32.mrf.mxu0
      %v1703 = vpop.f32.mrf.mxu0
      %v1704 = vadd.f32 %v1639, %v1703
      %v1705 = vpop.f32.mrf.mxu0
      %1706 = vdwg.mxu0
      %v1707 = vadd.f32 %v1315, %v1677
      %v1708 = vadd.f32 %v1318, %v1680
      %v1709 = vadd.f32 %v1323, %v1685
      %v1710 = vadd.f32 %v1326, %v1688
      %v1711 = vadd.f32 %v1331, %v1693
      %v1712 = vadd.f32 %v1334, %v1696
      %v1713 = vadd.f32 %v1339, %v1701
      %v1714 = vadd.f32 %v1342, %v1704
      %v1715 = vld [vmem:[%s2] sm:$0x1]
      %v1717 = vlaneseq
      %v1718 = vshrl.u32 %v1717, 7
      %v1719 = vsub.s32 0, %v1718
      %v1720 = vrot.slane %v1715, %v1719
      %v1722 = vmul.f32 %v1707, %v1720
      %v1723 = vmul.f32 %v1708, %v1720
      %v1724 = vmul.f32 %v1709, %v1720
      %v1725 = vmul.f32 %v1710, %v1720
      %v1726 = vmul.f32 %v1711, %v1720
      %v1727 = vmul.f32 %v1712, %v1720
      %v1728 = vmul.f32 %v1713, %v1720
      %v1729 = vmul.f32 %v1714, %v1720
      %v1730 = vld [vmem:[%s3] sm:$0x1]
      %v1732 = vlaneseq
      %v1733 = vshrl.u32 %v1732, 7
      %v1734 = vsub.s32 0, %v1733
      %v1735 = vrot.slane %v1730, %v1734
      %v1737 = vadd.f32 %v1722, %v1735
      %v1738 = vadd.f32 %v1723, %v1735
      %v1739 = vadd.f32 %v1724, %v1735
      %v1740 = vadd.f32 %v1725, %v1735
      %v1741 = vadd.f32 %v1726, %v1735
      %v1742 = vadd.f32 %v1727, %v1735
      %v1743 = vadd.f32 %v1728, %v1735
      %v1744 = vadd.f32 %v1729, %v1735
      %v1745 = vmax.f32 %v1737, 0.0
      %v1746 = vmax.f32 %v1738, 0.0
      %v1747 = vmax.f32 %v1739, 0.0
      %v1748 = vmax.f32 %v1740, 0.0
      %v1749 = vmax.f32 %v1741, 0.0
      %v1750 = vmax.f32 %v1742, 0.0
      %v1751 = vmax.f32 %v1743, 0.0
      %v1752 = vmax.f32 %v1744, 0.0
      %v1753 = vpack.c.bf16 %v1746, %v1745
      %v1754 = vpack.c.bf16 %v1748, %v1747
      %v1755 = vpack.c.bf16 %v1750, %v1749
      %v1756 = vpack.c.bf16 %v1752, %v1751
      %v1761 = vunpack.c.l.b16 %v1753
      %v1762 = vunpack.c.h.b16 %v1753
      %v1763 = vunpack.c.l.b16 %v1754
      %v1764 = vunpack.c.h.b16 %v1754
      %v1765 = vunpack.c.l.b16 %v1755
      %v1766 = vunpack.c.h.b16 %v1755
      %v1767 = vunpack.c.l.b16 %v1756
      %v1768 = vunpack.c.h.b16 %v1756
      %v1769 = vpack.c.b16 %v1761, %v1761
      %v1770 = vpack.c.b16 %v1762, %v1762
      %v1771 = vpack.c.b16 %v1763, %v1763
      %v1772 = vpack.c.b16 %v1764, %v1764
      %v1773 = vpack.c.b16 %v1765, %v1765
      %v1774 = vpack.c.b16 %v1766, %v1766
      %v1775 = vpack.c.b16 %v1767, %v1767
      %v1776 = vpack.c.b16 %v1768, %v1768
      %v1778 = vshrl.u32 0, 16
      %v1780 = vrot.slane %v1778, 7
      %v1781 = vshll.u32 0, 16
      %v1783 = vor.u32 %v1780, %v1781
      %v1785 = vshrl.u32 %v1769, 16
      %v1787 = vrot.slane %v1785, 7
      %v1788 = vshll.u32 %v1769, 16
      %v1790 = vor.u32 %v1787, %v1788
      %v1792 = vshrl.u32 %v1770, 16
      %v1794 = vrot.slane %v1792, 7
      %v1795 = vshll.u32 %v1770, 16
      %v1797 = vor.u32 %v1794, %v1795
      %v1799 = vshrl.u32 %v1771, 16
      %v1801 = vrot.slane %v1799, 7
      %v1802 = vshll.u32 %v1771, 16
      %v1804 = vor.u32 %v1801, %v1802
      %v1806 = vshrl.u32 %v1772, 16
      %v1808 = vrot.slane %v1806, 7
      %v1809 = vshll.u32 %v1772, 16
      %v1811 = vor.u32 %v1808, %v1809
      %v1813 = vshrl.u32 %v1773, 16
      %v1815 = vrot.slane %v1813, 7
      %v1816 = vshll.u32 %v1773, 16
      %v1818 = vor.u32 %v1815, %v1816
      %v1820 = vshrl.u32 %v1774, 16
      %v1822 = vrot.slane %v1820, 7
      %v1823 = vshll.u32 %v1774, 16
      %v1825 = vor.u32 %v1822, %v1823
      %v1827 = vshrl.u32 %v1775, 16
      %v1829 = vrot.slane %v1827, 7
      %v1830 = vshll.u32 %v1775, 16
      %v1832 = vor.u32 %v1829, %v1830
      %v1834 = vshrl.u32 %v1776, 16
      %v1836 = vrot.slane %v1834, 7
      %v1837 = vshll.u32 %v1776, 16
      %v1839 = vor.u32 %v1836, %v1837
      %vm1849 = vcmask 1040384
      %vm1850 = vsmask.f32 256
      %vm1851 = vmand %vm1849, %vm1850
      %v1852 = vsel %vm1851, 0, %v1783
      %v1853 = vsel %vm1851, 0, %v1790
      %v1854 = vsel %vm1851, 0, %v1797
      %v1855 = vsel %vm1851, 0, %v1804
      %v1856 = vsel %vm1851, 0, %v1811
      %v1857 = vsel %vm1851, 0, %v1818
      %v1858 = vsel %vm1851, 0, %v1825
      %v1859 = vsel %vm1851, 0, %v1832
      %v1860 = vsel %vm1851, 0, %v1839
      %vm1861 = vcmask 1044480
      %vm1862 = vsmask.f32 4352
      %vm1863 = vmand %vm1861, %vm1862
      %v1864 = vsel %vm1863, %v1852, 0
      %v1865 = vsel %vm1863, %v1853, 0
      %v1866 = vsel %vm1863, %v1854, 0
      %v1867 = vsel %vm1863, %v1855, 0
      %v1868 = vsel %vm1863, %v1856, 0
      %v1869 = vsel %vm1863, %v1857, 0
      %v1870 = vsel %vm1863, %v1858, 0
      %v1871 = vsel %vm1863, %v1859, 0
      %v1872 = vsel %vm1863, %v1860, 0
      %v1874 = vshrl.u32 %v1864, 16
      %v1876 = vshll.u32 %v1864, 16
      %v1878 = vrot.slane %v1876, 1
      %v1879 = vor.u32 %v1874, %v1878
      %v1881 = vshrl.u32 %v1865, 16
      %v1883 = vshll.u32 %v1865, 16
      %v1885 = vrot.slane %v1883, 1
      %v1886 = vor.u32 %v1881, %v1885
      %v1888 = vshrl.u32 %v1866, 16
      %v1890 = vshll.u32 %v1866, 16
      %v1892 = vrot.slane %v1890, 1
      %v1893 = vor.u32 %v1888, %v1892
      %v1895 = vshrl.u32 %v1867, 16
      %v1897 = vshll.u32 %v1867, 16
      %v1899 = vrot.slane %v1897, 1
      %v1900 = vor.u32 %v1895, %v1899
      %v1902 = vshrl.u32 %v1868, 16
      %v1904 = vshll.u32 %v1868, 16
      %v1906 = vrot.slane %v1904, 1
      %v1907 = vor.u32 %v1902, %v1906
      %v1909 = vshrl.u32 %v1869, 16
      %v1911 = vshll.u32 %v1869, 16
      %v1913 = vrot.slane %v1911, 1
      %v1914 = vor.u32 %v1909, %v1913
      %v1916 = vshrl.u32 %v1870, 16
      %v1918 = vshll.u32 %v1870, 16
      %v1920 = vrot.slane %v1918, 1
      %v1921 = vor.u32 %v1916, %v1920
      %v1923 = vshrl.u32 %v1871, 16
      %v1925 = vshll.u32 %v1871, 16
      %v1927 = vrot.slane %v1925, 1
      %v1928 = vor.u32 %v1923, %v1927
      %v1937 = vrot.slane %v1864, 1
      %v1938 = vrot.slane %v1865, 1
      %v1939 = vrot.slane %v1866, 1
      %v1940 = vrot.slane %v1867, 1
      %v1941 = vrot.slane %v1868, 1
      %v1942 = vrot.slane %v1869, 1
      %v1943 = vrot.slane %v1870, 1
      %v1944 = vrot.slane %v1871, 1
      %v1945 = vunpack.c.l.b16 %v1864
      %v1946 = vunpack.c.l.b16 %v1879
      %v1947 = vunpack.c.l.b16 %v1937
      %v1948 = vunpack.c.l.b16 %v1865
      %v1949 = vunpack.c.l.b16 %v1886
      %v1950 = vunpack.c.l.b16 %v1938
      %v1951 = vunpack.c.l.b16 %v1866
      %v1952 = vunpack.c.l.b16 %v1893
      %v1953 = vunpack.c.l.b16 %v1939
      %v1954 = vunpack.c.l.b16 %v1867
      %v1955 = vunpack.c.l.b16 %v1900
      %v1956 = vunpack.c.l.b16 %v1940
      %v1957 = vunpack.c.l.b16 %v1868
      %v1958 = vunpack.c.l.b16 %v1907
      %v1959 = vunpack.c.l.b16 %v1941
      %v1960 = vunpack.c.l.b16 %v1869
      %v1961 = vunpack.c.l.b16 %v1914
      %v1962 = vunpack.c.l.b16 %v1942
      %v1963 = vunpack.c.l.b16 %v1870
      %v1964 = vunpack.c.l.b16 %v1921
      %v1965 = vunpack.c.l.b16 %v1943
      %v1966 = vunpack.c.l.b16 %v1871
      %v1967 = vunpack.c.l.b16 %v1928
      %v1968 = vunpack.c.l.b16 %v1944
      %v1969 = vld [vmem:[%s4] sm:$0xf]
      %v1970 = vld [vmem:[%s4 + $0x4] sm:$0xf]
      %v1971 = vld [vmem:[%s4 + $0x8] sm:$0xf]
      %v1972 = vld [vmem:[%s4 + $0xc] sm:$0xf]
      %v1973 = vld [vmem:[%s4 + $0x10] sm:$0xf]
      %v1974 = vld [vmem:[%s4 + $0x14] sm:$0xf]
      %v1975 = vld [vmem:[%s4 + $0x18] sm:$0xf]
      %v1976 = vld [vmem:[%s4 + $0x1c] sm:$0xf]
      %v1977 = vld [vmem:[%s4 + $0x20] sm:$0xf]
      %v1978 = vld [vmem:[%s4 + $0x24] sm:$0xf]
      %v1979 = vld [vmem:[%s4 + $0x28] sm:$0xf]
      %v1980 = vld [vmem:[%s4 + $0x2c] sm:$0xf]
      %v1981 = vld [vmem:[%s4 + $0x30] sm:$0xf]
      %v1982 = vld [vmem:[%s4 + $0x34] sm:$0xf]
      %v1983 = vld [vmem:[%s4 + $0x38] sm:$0xf]
      %v1984 = vld [vmem:[%s4 + $0x3c] sm:$0xf]
      %v1985 = vld [vmem:[%s4 + $0x40] sm:$0xf]
      %v1986 = vld [vmem:[%s4 + $0x44] sm:$0xf]
      %v1987 = vld [vmem:[%s4 + $0x48] sm:$0xf]
      %v1988 = vld [vmem:[%s4 + $0x4c] sm:$0xf]
      %v1989 = vld [vmem:[%s4 + $0x50] sm:$0xf]
      %v1990 = vld [vmem:[%s4 + $0x54] sm:$0xf]
      %v1991 = vld [vmem:[%s4 + $0x58] sm:$0xf]
      %v1992 = vld [vmem:[%s4 + $0x5c] sm:$0xf]
      %v1993 = vld [vmem:[%s4 + $0x60] sm:$0xf]
      %v1994 = vld [vmem:[%s4 + $0x64] sm:$0xf]
      %v1995 = vld [vmem:[%s4 + $0x68] sm:$0xf]
      %v1996 = vld [vmem:[%s4 + $0x6c] sm:$0xf]
      %v1997 = vld [vmem:[%s4 + $0x70] sm:$0xf]
      %v1998 = vld [vmem:[%s4 + $0x74] sm:$0xf]
      %v1999 = vld [vmem:[%s4 + $0x78] sm:$0xf]
      %v2000 = vld [vmem:[%s4 + $0x7c] sm:$0xf]
      %v2001 = vld [vmem:[%s4 + $0x80] sm:$0xf]
      %v2002 = vld [vmem:[%s4 + $0x84] sm:$0xf]
      %v2003 = vld [vmem:[%s4 + $0x88] sm:$0xf]
      %v2004 = vld [vmem:[%s4 + $0x8c] sm:$0xf]
      %v2005 = vld [vmem:[%s4 + $0x90] sm:$0xf]
      %v2006 = vld [vmem:[%s4 + $0x94] sm:$0xf]
      %v2007 = vld [vmem:[%s4 + $0x98] sm:$0xf]
      %v2008 = vld [vmem:[%s4 + $0x9c] sm:$0xf]
      %v2009 = vld [vmem:[%s4 + $0xa0] sm:$0xf]
      %v2010 = vld [vmem:[%s4 + $0xa4] sm:$0xf]
      %v2011 = vld [vmem:[%s4 + $0xa8] sm:$0xf]
      %v2012 = vld [vmem:[%s4 + $0xac] sm:$0xf]
      %v2013 = vld [vmem:[%s4 + $0xb0] sm:$0xf]
      %v2014 = vld [vmem:[%s4 + $0xb4] sm:$0xf]
      %v2015 = vld [vmem:[%s4 + $0xb8] sm:$0xf]
      %v2016 = vld [vmem:[%s4 + $0xbc] sm:$0xf]
      %v2018 = vshrl.u32 %v1872, 16
      %v2020 = vshll.u32 %v1872, 16
      %v2022 = vrot.slane %v2020, 1
      %v2023 = vor.u32 %v2018, %v2022
      %v2025 = vrot.slane %v1872, 1
      %v2026 = vunpack.c.l.b16 %v1872
      %v2027 = vunpack.c.l.b16 %v2023
      %v2028 = vunpack.c.l.b16 %v2025
      %s2029 = scalar_lea.vmem %s4, 192
      %v2030 = vld [vmem:[%s2029] sm:$0xf]
      %v2031 = vld [vmem:[%s2029 + $0x4] sm:$0xf]
      %v2032 = vld [vmem:[%s2029 + $0x8] sm:$0xf]
      %v2033 = vld [vmem:[%s2029 + $0xc] sm:$0xf]
      %v2034 = vld [vmem:[%s2029 + $0x10] sm:$0xf]
      %v2035 = vld [vmem:[%s2029 + $0x14] sm:$0xf]
      %v2036 = vld [vmem:[%s2029 + $0x18] sm:$0xf]
      %v2037 = vld [vmem:[%s2029 + $0x1c] sm:$0xf]
      %v2038 = vld [vmem:[%s2029 + $0x20] sm:$0xf]
      %v2039 = vld [vmem:[%s2029 + $0x24] sm:$0xf]
      %v2040 = vld [vmem:[%s2029 + $0x28] sm:$0xf]
      %v2041 = vld [vmem:[%s2029 + $0x2c] sm:$0xf]
      %v2042 = vld [vmem:[%s2029 + $0x30] sm:$0xf]
      %v2043 = vld [vmem:[%s2029 + $0x34] sm:$0xf]
      %v2044 = vld [vmem:[%s2029 + $0x38] sm:$0xf]
      %v2045 = vld [vmem:[%s2029 + $0x3c] sm:$0xf]
      %v2046 = vld [vmem:[%s2029 + $0x40] sm:$0xf]
      %v2047 = vld [vmem:[%s2029 + $0x44] sm:$0xf]
      %v2048 = vld [vmem:[%s2029 + $0x48] sm:$0xf]
      %v2049 = vld [vmem:[%s2029 + $0x4c] sm:$0xf]
      %v2050 = vld [vmem:[%s2029 + $0x50] sm:$0xf]
      %v2051 = vld [vmem:[%s2029 + $0x54] sm:$0xf]
      %v2052 = vld [vmem:[%s2029 + $0x58] sm:$0xf]
      %v2053 = vld [vmem:[%s2029 + $0x5c] sm:$0xf]
      %v2054 = vld [vmem:[%s2029 + $0x60] sm:$0xf]
      %v2055 = vld [vmem:[%s2029 + $0x64] sm:$0xf]
      %v2056 = vld [vmem:[%s2029 + $0x68] sm:$0xf]
      %v2057 = vld [vmem:[%s2029 + $0x6c] sm:$0xf]
      %v2058 = vld [vmem:[%s2029 + $0x70] sm:$0xf]
      %v2059 = vld [vmem:[%s2029 + $0x74] sm:$0xf]
      %v2060 = vld [vmem:[%s2029 + $0x78] sm:$0xf]
      %v2061 = vld [vmem:[%s2029 + $0x7c] sm:$0xf]
      %v2062 = vld [vmem:[%s2029 + $0x80] sm:$0xf]
      %v2063 = vld [vmem:[%s2029 + $0x84] sm:$0xf]
      %v2064 = vld [vmem:[%s2029 + $0x88] sm:$0xf]
      %v2065 = vld [vmem:[%s2029 + $0x8c] sm:$0xf]
      %v2066 = vld [vmem:[%s2029 + $0x90] sm:$0xf]
      %v2067 = vld [vmem:[%s2029 + $0x94] sm:$0xf]
      %v2068 = vld [vmem:[%s2029 + $0x98] sm:$0xf]
      %v2069 = vld [vmem:[%s2029 + $0x9c] sm:$0xf]
      %v2070 = vld [vmem:[%s2029 + $0xa0] sm:$0xf]
      %v2071 = vld [vmem:[%s2029 + $0xa4] sm:$0xf]
      %v2072 = vld [vmem:[%s2029 + $0xa8] sm:$0xf]
      %v2073 = vld [vmem:[%s2029 + $0xac] sm:$0xf]
      %v2074 = vld [vmem:[%s2029 + $0xb0] sm:$0xf]
      %v2075 = vld [vmem:[%s2029 + $0xb4] sm:$0xf]
      %v2076 = vld [vmem:[%s2029 + $0xb8] sm:$0xf]
      %v2077 = vld [vmem:[%s2029 + $0xbc] sm:$0xf]
      %v2078 = vpack.c.b16 %v1951, %v1948
      %v2079 = vpack.c.b16 %v1952, %v1949
      %v2080 = vpack.c.b16 %v1953, %v1950
      %v2081 = vpack.c.b16 %v1957, %v1954
      %v2082 = vpack.c.b16 %v1958, %v1955
      %v2083 = vpack.c.b16 %v1959, %v1956
      %v2084 = vpack.c.b16 %v1963, %v1960
      %v2085 = vpack.c.b16 %v1964, %v1961
      %v2086 = vpack.c.b16 %v1965, %v1962
      %v2087 = vpack.c.b16 %v2026, %v1966
      %v2088 = vpack.c.b16 %v2027, %v1967
      %v2089 = vpack.c.b16 %v2028, %v1968
      %v2150 = vunpack.c.l.b16 %v2030
      %v2151 = vunpack.c.l.b16 %v2031
      %v2152 = vunpack.c.l.b16 %v2032
      %v2153 = vunpack.c.l.b16 %v2033
      %v2154 = vunpack.c.l.b16 %v2034
      %v2155 = vunpack.c.l.b16 %v2035
      %v2156 = vunpack.c.l.b16 %v2036
      %v2157 = vunpack.c.l.b16 %v2037
      %v2158 = vunpack.c.l.b16 %v2038
      %v2159 = vunpack.c.l.b16 %v2039
      %v2160 = vunpack.c.l.b16 %v2040
      %v2161 = vunpack.c.l.b16 %v2041
      %v2162 = vunpack.c.l.b16 %v2042
      %v2163 = vunpack.c.l.b16 %v2043
      %v2164 = vunpack.c.l.b16 %v2044
      %v2165 = vunpack.c.l.b16 %v2045
      %v2166 = vunpack.c.l.b16 %v2046
      %v2167 = vunpack.c.l.b16 %v2047
      %v2168 = vunpack.c.l.b16 %v2048
      %v2169 = vunpack.c.l.b16 %v2049
      %v2170 = vunpack.c.l.b16 %v2050
      %v2171 = vunpack.c.l.b16 %v2051
      %v2172 = vunpack.c.l.b16 %v2052
      %v2173 = vunpack.c.l.b16 %v2053
      %v2174 = vunpack.c.l.b16 %v2054
      %v2175 = vunpack.c.l.b16 %v2055
      %v2176 = vunpack.c.l.b16 %v2056
      %v2177 = vunpack.c.l.b16 %v2057
      %v2178 = vunpack.c.l.b16 %v2058
      %v2179 = vunpack.c.l.b16 %v2059
      %v2180 = vunpack.c.l.b16 %v2060
      %v2181 = vunpack.c.l.b16 %v2061
      %v2182 = vunpack.c.l.b16 %v2062
      %v2183 = vunpack.c.l.b16 %v2063
      %v2184 = vunpack.c.l.b16 %v2064
      %v2185 = vunpack.c.l.b16 %v2065
      %v2186 = vunpack.c.l.b16 %v2066
      %v2187 = vunpack.c.l.b16 %v2067
      %v2188 = vunpack.c.l.b16 %v2068
      %v2189 = vunpack.c.l.b16 %v2069
      %v2190 = vunpack.c.l.b16 %v2070
      %v2191 = vunpack.c.l.b16 %v2071
      %v2192 = vunpack.c.l.b16 %v2072
      %v2193 = vunpack.c.l.b16 %v2073
      %v2194 = vunpack.c.l.b16 %v2074
      %v2195 = vunpack.c.l.b16 %v2075
      %v2196 = vunpack.c.l.b16 %v2076
      %v2197 = vunpack.c.l.b16 %v2077
      %v2198 = vpack.c.b16 %v2151, %v2150
      %v2199 = vpack.c.b16 %v2153, %v2152
      %v2200 = vpack.c.b16 %v2155, %v2154
      %v2201 = vpack.c.b16 %v2157, %v2156
      %v2202 = vpack.c.b16 %v2159, %v2158
      %v2203 = vpack.c.b16 %v2161, %v2160
      %v2204 = vpack.c.b16 %v2163, %v2162
      %v2205 = vpack.c.b16 %v2165, %v2164
      %v2206 = vpack.c.b16 %v2167, %v2166
      %v2207 = vpack.c.b16 %v2169, %v2168
      %v2208 = vpack.c.b16 %v2171, %v2170
      %v2209 = vpack.c.b16 %v2173, %v2172
      %v2210 = vpack.c.b16 %v2175, %v2174
      %v2211 = vpack.c.b16 %v2177, %v2176
      %v2212 = vpack.c.b16 %v2179, %v2178
      %v2213 = vpack.c.b16 %v2181, %v2180
      %v2214 = vpack.c.b16 %v2183, %v2182
      %v2215 = vpack.c.b16 %v2185, %v2184
      %v2216 = vpack.c.b16 %v2187, %v2186
      %v2217 = vpack.c.b16 %v2189, %v2188
      %v2218 = vpack.c.b16 %v2191, %v2190
      %v2219 = vpack.c.b16 %v2193, %v2192
      %v2220 = vpack.c.b16 %v2195, %v2194
      %v2221 = vpack.c.b16 %v2197, %v2196
      %2246 = vmatprep.subr.bf16.mxu0 0
      %2247 = vmatpush1.bf16.msra.mxu0 %v2205
      %2248 = vmatprep.subr.bf16.mxu0 0
      %2249 = vmatpush1.bf16.msra.mxu0 %v2204
      %2250 = vmatprep.subr.bf16.mxu0 0
      %2251 = vmatpush1.bf16.msra.mxu0 %v2203
      %2252 = vmatprep.subr.bf16.mxu0 0
      %2253 = vmatpush1.bf16.msra.mxu0 %v2202
      %2254 = vmatprep.subr.bf16.mxu0 0
      %2255 = vmatpush1.bf16.msra.mxu0 %v2201
      %2256 = vmatprep.subr.bf16.mxu0 0
      %2257 = vmatpush1.bf16.msra.mxu0 %v2200
      %2258 = vmatprep.subr.bf16.mxu0 0
      %2259 = vmatpush1.bf16.msra.mxu0 %v2199
      %2260 = vmatprep.subr.bf16.mxu0 0
      %2261 = vmatpush1.bf16.msra.mxu0 %v2198
      %2262 = vmatprep.subr.bf16.mxu0 0
      %2263 = vmatpush2.bf16.msra.mxu0 %v2213
      %2264 = vmatprep.subr.bf16.mxu0 0
      %2265 = vmatpush2.bf16.msra.mxu0 %v2212
      %2266 = vmatprep.subr.bf16.mxu0 0
      %2267 = vmatpush2.bf16.msra.mxu0 %v2211
      %2268 = vmatprep.subr.bf16.mxu0 0
      %2269 = vmatpush2.bf16.msra.mxu0 %v2210
      %2270 = vmatprep.subr.bf16.mxu0 0
      %2271 = vmatpush2.bf16.msra.mxu0 %v2209
      %2272 = vmatprep.subr.bf16.mxu0 0
      %2273 = vmatpush2.bf16.msra.mxu0 %v2208
      %2274 = vmatprep.subr.bf16.mxu0 0
      %2275 = vmatpush2.bf16.msra.mxu0 %v2207
      %2276 = vmatprep.subr.bf16.mxu0 0
      %2277 = vmatpush2.bf16.msra.mxu0 %v2206
      %2278 = vmatprep.mubr.bf16.mxu0 %v2079
      %2279 = vmatmul.mubr.bf16.gmra.mxu0 %v2078
      %v2280 = vpop.f32.mrf.mxu0
      %v2281 = vadd.f32 0.0, %v2280
      %v2282 = vpop.f32.mrf.mxu0
      %v2283 = vpop.f32.mrf.mxu0
      %v2284 = vadd.f32 0.0, %v2283
      %v2285 = vpop.f32.mrf.mxu0
      %2286 = vmatprep.mubr.bf16.mxu0 %v2082
      %2287 = vmatmul.mubr.bf16.gmra.mxu0 %v2081
      %v2288 = vpop.f32.mrf.mxu0
      %v2289 = vadd.f32 0.0, %v2288
      %v2290 = vpop.f32.mrf.mxu0
      %v2291 = vpop.f32.mrf.mxu0
      %v2292 = vadd.f32 0.0, %v2291
      %v2293 = vpop.f32.mrf.mxu0
      %2294 = vmatprep.mubr.bf16.mxu0 %v2085
      %2295 = vmatmul.mubr.bf16.gmra.mxu0 %v2084
      %v2296 = vpop.f32.mrf.mxu0
      %v2297 = vadd.f32 0.0, %v2296
      %v2298 = vpop.f32.mrf.mxu0
      %v2299 = vpop.f32.mrf.mxu0
      %v2300 = vadd.f32 0.0, %v2299
      %v2301 = vpop.f32.mrf.mxu0
      %2302 = vmatprep.mubr.bf16.mxu0 %v2088
      %2303 = vmatmul.mubr.bf16.gmra.mxu0 %v2087
      %v2304 = vpop.f32.mrf.mxu0
      %v2305 = vadd.f32 0.0, %v2304
      %v2306 = vpop.f32.mrf.mxu0
      %v2307 = vpop.f32.mrf.mxu0
      %v2308 = vadd.f32 0.0, %v2307
      %v2309 = vpop.f32.mrf.mxu0
      %2310 = vdwg.mxu0
      %2311 = vmatprep.subr.bf16.mxu0 0
      %2312 = vmatpush1.bf16.msra.mxu0 %v2221
      %2313 = vmatprep.subr.bf16.mxu0 0
      %2314 = vmatpush1.bf16.msra.mxu0 %v2220
      %2315 = vmatprep.subr.bf16.mxu0 0
      %2316 = vmatpush1.bf16.msra.mxu0 %v2219
      %2317 = vmatprep.subr.bf16.mxu0 0
      %2318 = vmatpush1.bf16.msra.mxu0 %v2218
      %2319 = vmatprep.subr.bf16.mxu0 0
      %2320 = vmatpush1.bf16.msra.mxu0 %v2217
      %2321 = vmatprep.subr.bf16.mxu0 0
      %2322 = vmatpush1.bf16.msra.mxu0 %v2216
      %2323 = vmatprep.subr.bf16.mxu0 0
      %2324 = vmatpush1.bf16.msra.mxu0 %v2215
      %2325 = vmatprep.subr.bf16.mxu0 0
      %2326 = vmatpush1.bf16.msra.mxu0 %v2214
      %2327 = vmatprep.subr.bf16.mxu0 0
      %2328 = vmatpush2.bf16.msra.mxu0 0
      %2329 = vmatprep.subr.bf16.mxu0 0
      %2330 = vmatpush2.bf16.msra.mxu0 0
      %2331 = vmatprep.subr.bf16.mxu0 0
      %2332 = vmatpush2.bf16.msra.mxu0 0
      %2333 = vmatprep.subr.bf16.mxu0 0
      %2334 = vmatpush2.bf16.msra.mxu0 0
      %2335 = vmatprep.subr.bf16.mxu0 0
      %2336 = vmatpush2.bf16.msra.mxu0 0
      %2337 = vmatprep.subr.bf16.mxu0 0
      %2338 = vmatpush2.bf16.msra.mxu0 0
      %2339 = vmatprep.subr.bf16.mxu0 0
      %2340 = vmatpush2.bf16.msra.mxu0 0
      %2341 = vmatprep.subr.bf16.mxu0 0
      %2342 = vmatpush2.bf16.msra.mxu0 0
      %2343 = vmatprep.mubr.bf16.mxu0 0
      %2344 = vmatmul.mubr.bf16.gmra.mxu0 %v2080
      %v2345 = vpop.f32.mrf.mxu0
      %v2346 = vadd.f32 %v2281, %v2345
      %v2347 = vpop.f32.mrf.mxu0
      %v2348 = vpop.f32.mrf.mxu0
      %v2349 = vadd.f32 %v2284, %v2348
      %v2350 = vpop.f32.mrf.mxu0
      %2351 = vmatprep.mubr.bf16.mxu0 0
      %2352 = vmatmul.mubr.bf16.gmra.mxu0 %v2083
      %v2353 = vpop.f32.mrf.mxu0
      %v2354 = vadd.f32 %v2289, %v2353
      %v2355 = vpop.f32.mrf.mxu0
      %v2356 = vpop.f32.mrf.mxu0
      %v2357 = vadd.f32 %v2292, %v2356
      %v2358 = vpop.f32.mrf.mxu0
      %2359 = vmatprep.mubr.bf16.mxu0 0
      %2360 = vmatmul.mubr.bf16.gmra.mxu0 %v2086
      %v2361 = vpop.f32.mrf.mxu0
      %v2362 = vadd.f32 %v2297, %v2361
      %v2363 = vpop.f32.mrf.mxu0
      %v2364 = vpop.f32.mrf.mxu0
      %v2365 = vadd.f32 %v2300, %v2364
      %v2366 = vpop.f32.mrf.mxu0
      %2367 = vmatprep.mubr.bf16.mxu0 0
      %2368 = vmatmul.mubr.bf16.gmra.mxu0 %v2089
      %v2369 = vpop.f32.mrf.mxu0
      %v2370 = vadd.f32 %v2305, %v2369
      %v2371 = vpop.f32.mrf.mxu0
      %v2372 = vpop.f32.mrf.mxu0
      %v2373 = vadd.f32 %v2308, %v2372
      %v2374 = vpop.f32.mrf.mxu0
      %2375 = vdwg.mxu0
      %v2376 = vpack.c.b16 %v1948, %v1945
      %v2377 = vpack.c.b16 %v1949, %v1946
      %v2378 = vpack.c.b16 %v1950, %v1947
      %v2379 = vpack.c.b16 %v1954, %v1951
      %v2380 = vpack.c.b16 %v1955, %v1952
      %v2381 = vpack.c.b16 %v1956, %v1953
      %v2382 = vpack.c.b16 %v1960, %v1957
      %v2383 = vpack.c.b16 %v1961, %v1958
      %v2384 = vpack.c.b16 %v1962, %v1959
      %v2385 = vpack.c.b16 %v1966, %v1963
      %v2386 = vpack.c.b16 %v1967, %v1964
      %v2387 = vpack.c.b16 %v1968, %v1965
      %v2448 = vunpack.c.l.b16 %v1969
      %v2449 = vunpack.c.l.b16 %v1970
      %v2450 = vunpack.c.l.b16 %v1971
      %v2451 = vunpack.c.l.b16 %v1972
      %v2452 = vunpack.c.l.b16 %v1973
      %v2453 = vunpack.c.l.b16 %v1974
      %v2454 = vunpack.c.l.b16 %v1975
      %v2455 = vunpack.c.l.b16 %v1976
      %v2456 = vunpack.c.l.b16 %v1977
      %v2457 = vunpack.c.l.b16 %v1978
      %v2458 = vunpack.c.l.b16 %v1979
      %v2459 = vunpack.c.l.b16 %v1980
      %v2460 = vunpack.c.l.b16 %v1981
      %v2461 = vunpack.c.l.b16 %v1982
      %v2462 = vunpack.c.l.b16 %v1983
      %v2463 = vunpack.c.l.b16 %v1984
      %v2464 = vunpack.c.l.b16 %v1985
      %v2465 = vunpack.c.l.b16 %v1986
      %v2466 = vunpack.c.l.b16 %v1987
      %v2467 = vunpack.c.l.b16 %v1988
      %v2468 = vunpack.c.l.b16 %v1989
      %v2469 = vunpack.c.l.b16 %v1990
      %v2470 = vunpack.c.l.b16 %v1991
      %v2471 = vunpack.c.l.b16 %v1992
      %v2472 = vunpack.c.l.b16 %v1993
      %v2473 = vunpack.c.l.b16 %v1994
      %v2474 = vunpack.c.l.b16 %v1995
      %v2475 = vunpack.c.l.b16 %v1996
      %v2476 = vunpack.c.l.b16 %v1997
      %v2477 = vunpack.c.l.b16 %v1998
      %v2478 = vunpack.c.l.b16 %v1999
      %v2479 = vunpack.c.l.b16 %v2000
      %v2480 = vunpack.c.l.b16 %v2001
      %v2481 = vunpack.c.l.b16 %v2002
      %v2482 = vunpack.c.l.b16 %v2003
      %v2483 = vunpack.c.l.b16 %v2004
      %v2484 = vunpack.c.l.b16 %v2005
      %v2485 = vunpack.c.l.b16 %v2006
      %v2486 = vunpack.c.l.b16 %v2007
      %v2487 = vunpack.c.l.b16 %v2008
      %v2488 = vunpack.c.l.b16 %v2009
      %v2489 = vunpack.c.l.b16 %v2010
      %v2490 = vunpack.c.l.b16 %v2011
      %v2491 = vunpack.c.l.b16 %v2012
      %v2492 = vunpack.c.l.b16 %v2013
      %v2493 = vunpack.c.l.b16 %v2014
      %v2494 = vunpack.c.l.b16 %v2015
      %v2495 = vunpack.c.l.b16 %v2016
      %v2496 = vpack.c.b16 %v2449, %v2448
      %v2497 = vpack.c.b16 %v2451, %v2450
      %v2498 = vpack.c.b16 %v2453, %v2452
      %v2499 = vpack.c.b16 %v2455, %v2454
      %v2500 = vpack.c.b16 %v2457, %v2456
      %v2501 = vpack.c.b16 %v2459, %v2458
      %v2502 = vpack.c.b16 %v2461, %v2460
      %v2503 = vpack.c.b16 %v2463, %v2462
      %v2504 = vpack.c.b16 %v2465, %v2464
      %v2505 = vpack.c.b16 %v2467, %v2466
      %v2506 = vpack.c.b16 %v2469, %v2468
      %v2507 = vpack.c.b16 %v2471, %v2470
      %v2508 = vpack.c.b16 %v2473, %v2472
      %v2509 = vpack.c.b16 %v2475, %v2474
      %v2510 = vpack.c.b16 %v2477, %v2476
      %v2511 = vpack.c.b16 %v2479, %v2478
      %v2512 = vpack.c.b16 %v2481, %v2480
      %v2513 = vpack.c.b16 %v2483, %v2482
      %v2514 = vpack.c.b16 %v2485, %v2484
      %v2515 = vpack.c.b16 %v2487, %v2486
      %v2516 = vpack.c.b16 %v2489, %v2488
      %v2517 = vpack.c.b16 %v2491, %v2490
      %v2518 = vpack.c.b16 %v2493, %v2492
      %v2519 = vpack.c.b16 %v2495, %v2494
      %2544 = vmatprep.subr.bf16.mxu0 0
      %2545 = vmatpush1.bf16.msra.mxu0 %v2503
      %2546 = vmatprep.subr.bf16.mxu0 0
      %2547 = vmatpush1.bf16.msra.mxu0 %v2502
      %2548 = vmatprep.subr.bf16.mxu0 0
      %2549 = vmatpush1.bf16.msra.mxu0 %v2501
      %2550 = vmatprep.subr.bf16.mxu0 0
      %2551 = vmatpush1.bf16.msra.mxu0 %v2500
      %2552 = vmatprep.subr.bf16.mxu0 0
      %2553 = vmatpush1.bf16.msra.mxu0 %v2499
      %2554 = vmatprep.subr.bf16.mxu0 0
      %2555 = vmatpush1.bf16.msra.mxu0 %v2498
      %2556 = vmatprep.subr.bf16.mxu0 0
      %2557 = vmatpush1.bf16.msra.mxu0 %v2497
      %2558 = vmatprep.subr.bf16.mxu0 0
      %2559 = vmatpush1.bf16.msra.mxu0 %v2496
      %2560 = vmatprep.subr.bf16.mxu0 0
      %2561 = vmatpush2.bf16.msra.mxu0 %v2511
      %2562 = vmatprep.subr.bf16.mxu0 0
      %2563 = vmatpush2.bf16.msra.mxu0 %v2510
      %2564 = vmatprep.subr.bf16.mxu0 0
      %2565 = vmatpush2.bf16.msra.mxu0 %v2509
      %2566 = vmatprep.subr.bf16.mxu0 0
      %2567 = vmatpush2.bf16.msra.mxu0 %v2508
      %2568 = vmatprep.subr.bf16.mxu0 0
      %2569 = vmatpush2.bf16.msra.mxu0 %v2507
      %2570 = vmatprep.subr.bf16.mxu0 0
      %2571 = vmatpush2.bf16.msra.mxu0 %v2506
      %2572 = vmatprep.subr.bf16.mxu0 0
      %2573 = vmatpush2.bf16.msra.mxu0 %v2505
      %2574 = vmatprep.subr.bf16.mxu0 0
      %2575 = vmatpush2.bf16.msra.mxu0 %v2504
      %2576 = vmatprep.mubr.bf16.mxu0 %v2377
      %2577 = vmatmul.mubr.bf16.gmra.mxu0 %v2376
      %v2578 = vpop.f32.mrf.mxu0
      %v2579 = vadd.f32 %v2346, %v2578
      %v2580 = vpop.f32.mrf.mxu0
      %v2581 = vpop.f32.mrf.mxu0
      %v2582 = vadd.f32 %v2349, %v2581
      %v2583 = vpop.f32.mrf.mxu0
      %2584 = vmatprep.mubr.bf16.mxu0 %v2380
      %2585 = vmatmul.mubr.bf16.gmra.mxu0 %v2379
      %v2586 = vpop.f32.mrf.mxu0
      %v2587 = vadd.f32 %v2354, %v2586
      %v2588 = vpop.f32.mrf.mxu0
      %v2589 = vpop.f32.mrf.mxu0
      %v2590 = vadd.f32 %v2357, %v2589
      %v2591 = vpop.f32.mrf.mxu0
      %2592 = vmatprep.mubr.bf16.mxu0 %v2383
      %2593 = vmatmul.mubr.bf16.gmra.mxu0 %v2382
      %v2594 = vpop.f32.mrf.mxu0
      %v2595 = vadd.f32 %v2362, %v2594
      %v2596 = vpop.f32.mrf.mxu0
      %v2597 = vpop.f32.mrf.mxu0
      %v2598 = vadd.f32 %v2365, %v2597
      %v2599 = vpop.f32.mrf.mxu0
      %2600 = vmatprep.mubr.bf16.mxu0 %v2386
      %2601 = vmatmul.mubr.bf16.gmra.mxu0 %v2385
      %v2602 = vpop.f32.mrf.mxu0
      %v2603 = vadd.f32 %v2370, %v2602
      %v2604 = vpop.f32.mrf.mxu0
      %v2605 = vpop.f32.mrf.mxu0
      %v2606 = vadd.f32 %v2373, %v2605
      %v2607 = vpop.f32.mrf.mxu0
      %2608 = vdwg.mxu0
      %2609 = vmatprep.subr.bf16.mxu0 0
      %2610 = vmatpush1.bf16.msra.mxu0 %v2519
      %2611 = vmatprep.subr.bf16.mxu0 0
      %2612 = vmatpush1.bf16.msra.mxu0 %v2518
      %2613 = vmatprep.subr.bf16.mxu0 0
      %2614 = vmatpush1.bf16.msra.mxu0 %v2517
      %2615 = vmatprep.subr.bf16.mxu0 0
      %2616 = vmatpush1.bf16.msra.mxu0 %v2516
      %2617 = vmatprep.subr.bf16.mxu0 0
      %2618 = vmatpush1.bf16.msra.mxu0 %v2515
      %2619 = vmatprep.subr.bf16.mxu0 0
      %2620 = vmatpush1.bf16.msra.mxu0 %v2514
      %2621 = vmatprep.subr.bf16.mxu0 0
      %2622 = vmatpush1.bf16.msra.mxu0 %v2513
      %2623 = vmatprep.subr.bf16.mxu0 0
      %2624 = vmatpush1.bf16.msra.mxu0 %v2512
      %2625 = vmatprep.subr.bf16.mxu0 0
      %2626 = vmatpush2.bf16.msra.mxu0 0
      %2627 = vmatprep.subr.bf16.mxu0 0
      %2628 = vmatpush2.bf16.msra.mxu0 0
      %2629 = vmatprep.subr.bf16.mxu0 0
      %2630 = vmatpush2.bf16.msra.mxu0 0
      %2631 = vmatprep.subr.bf16.mxu0 0
      %2632 = vmatpush2.bf16.msra.mxu0 0
      %2633 = vmatprep.subr.bf16.mxu0 0
      %2634 = vmatpush2.bf16.msra.mxu0 0
      %2635 = vmatprep.subr.bf16.mxu0 0
      %2636 = vmatpush2.bf16.msra.mxu0 0
      %2637 = vmatprep.subr.bf16.mxu0 0
      %2638 = vmatpush2.bf16.msra.mxu0 0
      %2639 = vmatprep.subr.bf16.mxu0 0
      %2640 = vmatpush2.bf16.msra.mxu0 0
      %2641 = vmatprep.mubr.bf16.mxu0 0
      %2642 = vmatmul.mubr.bf16.gmra.mxu0 %v2378
      %v2643 = vpop.f32.mrf.mxu0
      %v2644 = vadd.f32 %v2579, %v2643
      %v2645 = vpop.f32.mrf.mxu0
      %v2646 = vpop.f32.mrf.mxu0
      %v2647 = vadd.f32 %v2582, %v2646
      %v2648 = vpop.f32.mrf.mxu0
      %2649 = vmatprep.mubr.bf16.mxu0 0
      %2650 = vmatmul.mubr.bf16.gmra.mxu0 %v2381
      %v2651 = vpop.f32.mrf.mxu0
      %v2652 = vadd.f32 %v2587, %v2651
      %v2653 = vpop.f32.mrf.mxu0
      %v2654 = vpop.f32.mrf.mxu0
      %v2655 = vadd.f32 %v2590, %v2654
      %v2656 = vpop.f32.mrf.mxu0
      %2657 = vmatprep.mubr.bf16.mxu0 0
      %2658 = vmatmul.mubr.bf16.gmra.mxu0 %v2384
      %v2659 = vpop.f32.mrf.mxu0
      %v2660 = vadd.f32 %v2595, %v2659
      %v2661 = vpop.f32.mrf.mxu0
      %v2662 = vpop.f32.mrf.mxu0
      %v2663 = vadd.f32 %v2598, %v2662
      %v2664 = vpop.f32.mrf.mxu0
      %2665 = vmatprep.mubr.bf16.mxu0 0
      %2666 = vmatmul.mubr.bf16.gmra.mxu0 %v2387
      %v2667 = vpop.f32.mrf.mxu0
      %v2668 = vadd.f32 %v2603, %v2667
      %v2669 = vpop.f32.mrf.mxu0
      %v2670 = vpop.f32.mrf.mxu0
      %v2671 = vadd.f32 %v2606, %v2670
      %v2672 = vpop.f32.mrf.mxu0
      %2673 = vdwg.mxu0
      %s2674 = scalar_lea.vmem %s4, 384
      %v2675 = vld [vmem:[%s2674] sm:$0xf]
      %v2676 = vld [vmem:[%s2674 + $0x4] sm:$0xf]
      %v2677 = vld [vmem:[%s2674 + $0x8] sm:$0xf]
      %v2678 = vld [vmem:[%s2674 + $0xc] sm:$0xf]
      %v2679 = vld [vmem:[%s2674 + $0x10] sm:$0xf]
      %v2680 = vld [vmem:[%s2674 + $0x14] sm:$0xf]
      %v2681 = vld [vmem:[%s2674 + $0x18] sm:$0xf]
      %v2682 = vld [vmem:[%s2674 + $0x1c] sm:$0xf]
      %v2683 = vld [vmem:[%s2674 + $0x20] sm:$0xf]
      %v2684 = vld [vmem:[%s2674 + $0x24] sm:$0xf]
      %v2685 = vld [vmem:[%s2674 + $0x28] sm:$0xf]
      %v2686 = vld [vmem:[%s2674 + $0x2c] sm:$0xf]
      %v2687 = vld [vmem:[%s2674 + $0x30] sm:$0xf]
      %v2688 = vld [vmem:[%s2674 + $0x34] sm:$0xf]
      %v2689 = vld [vmem:[%s2674 + $0x38] sm:$0xf]
      %v2690 = vld [vmem:[%s2674 + $0x3c] sm:$0xf]
      %v2691 = vld [vmem:[%s2674 + $0x40] sm:$0xf]
      %v2692 = vld [vmem:[%s2674 + $0x44] sm:$0xf]
      %v2693 = vld [vmem:[%s2674 + $0x48] sm:$0xf]
      %v2694 = vld [vmem:[%s2674 + $0x4c] sm:$0xf]
      %v2695 = vld [vmem:[%s2674 + $0x50] sm:$0xf]
      %v2696 = vld [vmem:[%s2674 + $0x54] sm:$0xf]
      %v2697 = vld [vmem:[%s2674 + $0x58] sm:$0xf]
      %v2698 = vld [vmem:[%s2674 + $0x5c] sm:$0xf]
      %v2699 = vld [vmem:[%s2674 + $0x60] sm:$0xf]
      %v2700 = vld [vmem:[%s2674 + $0x64] sm:$0xf]
      %v2701 = vld [vmem:[%s2674 + $0x68] sm:$0xf]
      %v2702 = vld [vmem:[%s2674 + $0x6c] sm:$0xf]
      %v2703 = vld [vmem:[%s2674 + $0x70] sm:$0xf]
      %v2704 = vld [vmem:[%s2674 + $0x74] sm:$0xf]
      %v2705 = vld [vmem:[%s2674 + $0x78] sm:$0xf]
      %v2706 = vld [vmem:[%s2674 + $0x7c] sm:$0xf]
      %v2707 = vld [vmem:[%s2674 + $0x80] sm:$0xf]
      %v2708 = vld [vmem:[%s2674 + $0x84] sm:$0xf]
      %v2709 = vld [vmem:[%s2674 + $0x88] sm:$0xf]
      %v2710 = vld [vmem:[%s2674 + $0x8c] sm:$0xf]
      %v2711 = vld [vmem:[%s2674 + $0x90] sm:$0xf]
      %v2712 = vld [vmem:[%s2674 + $0x94] sm:$0xf]
      %v2713 = vld [vmem:[%s2674 + $0x98] sm:$0xf]
      %v2714 = vld [vmem:[%s2674 + $0x9c] sm:$0xf]
      %v2715 = vld [vmem:[%s2674 + $0xa0] sm:$0xf]
      %v2716 = vld [vmem:[%s2674 + $0xa4] sm:$0xf]
      %v2717 = vld [vmem:[%s2674 + $0xa8] sm:$0xf]
      %v2718 = vld [vmem:[%s2674 + $0xac] sm:$0xf]
      %v2719 = vld [vmem:[%s2674 + $0xb0] sm:$0xf]
      %v2720 = vld [vmem:[%s2674 + $0xb4] sm:$0xf]
      %v2721 = vld [vmem:[%s2674 + $0xb8] sm:$0xf]
      %v2722 = vld [vmem:[%s2674 + $0xbc] sm:$0xf]
      %v2723 = vpack.c.b16 %v1945, %v2026
      %v2724 = vpack.c.b16 %v1946, %v2027
      %v2725 = vpack.c.b16 %v1947, %v2028
      %v2777 = vunpack.c.l.b16 %v2675
      %v2778 = vunpack.c.l.b16 %v2676
      %v2779 = vunpack.c.l.b16 %v2677
      %v2780 = vunpack.c.l.b16 %v2678
      %v2781 = vunpack.c.l.b16 %v2679
      %v2782 = vunpack.c.l.b16 %v2680
      %v2783 = vunpack.c.l.b16 %v2681
      %v2784 = vunpack.c.l.b16 %v2682
      %v2785 = vunpack.c.l.b16 %v2683
      %v2786 = vunpack.c.l.b16 %v2684
      %v2787 = vunpack.c.l.b16 %v2685
      %v2788 = vunpack.c.l.b16 %v2686
      %v2789 = vunpack.c.l.b16 %v2687
      %v2790 = vunpack.c.l.b16 %v2688
      %v2791 = vunpack.c.l.b16 %v2689
      %v2792 = vunpack.c.l.b16 %v2690
      %v2793 = vunpack.c.l.b16 %v2691
      %v2794 = vunpack.c.l.b16 %v2692
      %v2795 = vunpack.c.l.b16 %v2693
      %v2796 = vunpack.c.l.b16 %v2694
      %v2797 = vunpack.c.l.b16 %v2695
      %v2798 = vunpack.c.l.b16 %v2696
      %v2799 = vunpack.c.l.b16 %v2697
      %v2800 = vunpack.c.l.b16 %v2698
      %v2801 = vunpack.c.l.b16 %v2699
      %v2802 = vunpack.c.l.b16 %v2700
      %v2803 = vunpack.c.l.b16 %v2701
      %v2804 = vunpack.c.l.b16 %v2702
      %v2805 = vunpack.c.l.b16 %v2703
      %v2806 = vunpack.c.l.b16 %v2704
      %v2807 = vunpack.c.l.b16 %v2705
      %v2808 = vunpack.c.l.b16 %v2706
      %v2809 = vunpack.c.l.b16 %v2707
      %v2810 = vunpack.c.l.b16 %v2708
      %v2811 = vunpack.c.l.b16 %v2709
      %v2812 = vunpack.c.l.b16 %v2710
      %v2813 = vunpack.c.l.b16 %v2711
      %v2814 = vunpack.c.l.b16 %v2712
      %v2815 = vunpack.c.l.b16 %v2713
      %v2816 = vunpack.c.l.b16 %v2714
      %v2817 = vunpack.c.l.b16 %v2715
      %v2818 = vunpack.c.l.b16 %v2716
      %v2819 = vunpack.c.l.b16 %v2717
      %v2820 = vunpack.c.l.b16 %v2718
      %v2821 = vunpack.c.l.b16 %v2719
      %v2822 = vunpack.c.l.b16 %v2720
      %v2823 = vunpack.c.l.b16 %v2721
      %v2824 = vunpack.c.l.b16 %v2722
      %v2825 = vpack.c.b16 %v2778, %v2777
      %v2826 = vpack.c.b16 %v2780, %v2779
      %v2827 = vpack.c.b16 %v2782, %v2781
      %v2828 = vpack.c.b16 %v2784, %v2783
      %v2829 = vpack.c.b16 %v2786, %v2785
      %v2830 = vpack.c.b16 %v2788, %v2787
      %v2831 = vpack.c.b16 %v2790, %v2789
      %v2832 = vpack.c.b16 %v2792, %v2791
      %v2833 = vpack.c.b16 %v2794, %v2793
      %v2834 = vpack.c.b16 %v2796, %v2795
      %v2835 = vpack.c.b16 %v2798, %v2797
      %v2836 = vpack.c.b16 %v2800, %v2799
      %v2837 = vpack.c.b16 %v2802, %v2801
      %v2838 = vpack.c.b16 %v2804, %v2803
      %v2839 = vpack.c.b16 %v2806, %v2805
      %v2840 = vpack.c.b16 %v2808, %v2807
      %v2841 = vpack.c.b16 %v2810, %v2809
      %v2842 = vpack.c.b16 %v2812, %v2811
      %v2843 = vpack.c.b16 %v2814, %v2813
      %v2844 = vpack.c.b16 %v2816, %v2815
      %v2845 = vpack.c.b16 %v2818, %v2817
      %v2846 = vpack.c.b16 %v2820, %v2819
      %v2847 = vpack.c.b16 %v2822, %v2821
      %v2848 = vpack.c.b16 %v2824, %v2823
      %2873 = vmatprep.subr.bf16.mxu0 0
      %2874 = vmatpush1.bf16.msra.mxu0 %v2832
      %2875 = vmatprep.subr.bf16.mxu0 0
      %2876 = vmatpush1.bf16.msra.mxu0 %v2831
      %2877 = vmatprep.subr.bf16.mxu0 0
      %2878 = vmatpush1.bf16.msra.mxu0 %v2830
      %2879 = vmatprep.subr.bf16.mxu0 0
      %2880 = vmatpush1.bf16.msra.mxu0 %v2829
      %2881 = vmatprep.subr.bf16.mxu0 0
      %2882 = vmatpush1.bf16.msra.mxu0 %v2828
      %2883 = vmatprep.subr.bf16.mxu0 0
      %2884 = vmatpush1.bf16.msra.mxu0 %v2827
      %2885 = vmatprep.subr.bf16.mxu0 0
      %2886 = vmatpush1.bf16.msra.mxu0 %v2826
      %2887 = vmatprep.subr.bf16.mxu0 0
      %2888 = vmatpush1.bf16.msra.mxu0 %v2825
      %2889 = vmatprep.subr.bf16.mxu0 0
      %2890 = vmatpush2.bf16.msra.mxu0 %v2840
      %2891 = vmatprep.subr.bf16.mxu0 0
      %2892 = vmatpush2.bf16.msra.mxu0 %v2839
      %2893 = vmatprep.subr.bf16.mxu0 0
      %2894 = vmatpush2.bf16.msra.mxu0 %v2838
      %2895 = vmatprep.subr.bf16.mxu0 0
      %2896 = vmatpush2.bf16.msra.mxu0 %v2837
      %2897 = vmatprep.subr.bf16.mxu0 0
      %2898 = vmatpush2.bf16.msra.mxu0 %v2836
      %2899 = vmatprep.subr.bf16.mxu0 0
      %2900 = vmatpush2.bf16.msra.mxu0 %v2835
      %2901 = vmatprep.subr.bf16.mxu0 0
      %2902 = vmatpush2.bf16.msra.mxu0 %v2834
      %2903 = vmatprep.subr.bf16.mxu0 0
      %2904 = vmatpush2.bf16.msra.mxu0 %v2833
      %2905 = vmatprep.mubr.bf16.mxu0 %v2380
      %2906 = vmatmul.mubr.bf16.gmra.mxu0 %v2379
      %v2907 = vpop.f32.mrf.mxu0
      %v2908 = vadd.f32 0.0, %v2907
      %v2909 = vpop.f32.mrf.mxu0
      %v2910 = vpop.f32.mrf.mxu0
      %v2911 = vadd.f32 0.0, %v2910
      %v2912 = vpop.f32.mrf.mxu0
      %2913 = vmatprep.mubr.bf16.mxu0 %v2383
      %2914 = vmatmul.mubr.bf16.gmra.mxu0 %v2382
      %v2915 = vpop.f32.mrf.mxu0
      %v2916 = vadd.f32 0.0, %v2915
      %v2917 = vpop.f32.mrf.mxu0
      %v2918 = vpop.f32.mrf.mxu0
      %v2919 = vadd.f32 0.0, %v2918
      %v2920 = vpop.f32.mrf.mxu0
      %2921 = vmatprep.mubr.bf16.mxu0 %v2386
      %2922 = vmatmul.mubr.bf16.gmra.mxu0 %v2385
      %v2923 = vpop.f32.mrf.mxu0
      %v2924 = vadd.f32 0.0, %v2923
      %v2925 = vpop.f32.mrf.mxu0
      %v2926 = vpop.f32.mrf.mxu0
      %v2927 = vadd.f32 0.0, %v2926
      %v2928 = vpop.f32.mrf.mxu0
      %2929 = vmatprep.mubr.bf16.mxu0 %v2724
      %2930 = vmatmul.mubr.bf16.gmra.mxu0 %v2723
      %v2931 = vpop.f32.mrf.mxu0
      %v2932 = vadd.f32 0.0, %v2931
      %v2933 = vpop.f32.mrf.mxu0
      %v2934 = vpop.f32.mrf.mxu0
      %v2935 = vadd.f32 0.0, %v2934
      %v2936 = vpop.f32.mrf.mxu0
      %2937 = vdwg.mxu0
      %2938 = vmatprep.subr.bf16.mxu0 0
      %2939 = vmatpush1.bf16.msra.mxu0 %v2848
      %2940 = vmatprep.subr.bf16.mxu0 0
      %2941 = vmatpush1.bf16.msra.mxu0 %v2847
      %2942 = vmatprep.subr.bf16.mxu0 0
      %2943 = vmatpush1.bf16.msra.mxu0 %v2846
      %2944 = vmatprep.subr.bf16.mxu0 0
      %2945 = vmatpush1.bf16.msra.mxu0 %v2845
      %2946 = vmatprep.subr.bf16.mxu0 0
      %2947 = vmatpush1.bf16.msra.mxu0 %v2844
      %2948 = vmatprep.subr.bf16.mxu0 0
      %2949 = vmatpush1.bf16.msra.mxu0 %v2843
      %2950 = vmatprep.subr.bf16.mxu0 0
      %2951 = vmatpush1.bf16.msra.mxu0 %v2842
      %2952 = vmatprep.subr.bf16.mxu0 0
      %2953 = vmatpush1.bf16.msra.mxu0 %v2841
      %2954 = vmatprep.subr.bf16.mxu0 0
      %2955 = vmatpush2.bf16.msra.mxu0 0
      %2956 = vmatprep.subr.bf16.mxu0 0
      %2957 = vmatpush2.bf16.msra.mxu0 0
      %2958 = vmatprep.subr.bf16.mxu0 0
      %2959 = vmatpush2.bf16.msra.mxu0 0
      %2960 = vmatprep.subr.bf16.mxu0 0
      %2961 = vmatpush2.bf16.msra.mxu0 0
      %2962 = vmatprep.subr.bf16.mxu0 0
      %2963 = vmatpush2.bf16.msra.mxu0 0
      %2964 = vmatprep.subr.bf16.mxu0 0
      %2965 = vmatpush2.bf16.msra.mxu0 0
      %2966 = vmatprep.subr.bf16.mxu0 0
      %2967 = vmatpush2.bf16.msra.mxu0 0
      %2968 = vmatprep.subr.bf16.mxu0 0
      %2969 = vmatpush2.bf16.msra.mxu0 0
      %2970 = vmatprep.mubr.bf16.mxu0 0
      %2971 = vmatmul.mubr.bf16.gmra.mxu0 %v2381
      %v2972 = vpop.f32.mrf.mxu0
      %v2973 = vadd.f32 %v2908, %v2972
      %v2974 = vpop.f32.mrf.mxu0
      %v2975 = vpop.f32.mrf.mxu0
      %v2976 = vadd.f32 %v2911, %v2975
      %v2977 = vpop.f32.mrf.mxu0
      %2978 = vmatprep.mubr.bf16.mxu0 0
      %2979 = vmatmul.mubr.bf16.gmra.mxu0 %v2384
      %v2980 = vpop.f32.mrf.mxu0
      %v2981 = vadd.f32 %v2916, %v2980
      %v2982 = vpop.f32.mrf.mxu0
      %v2983 = vpop.f32.mrf.mxu0
      %v2984 = vadd.f32 %v2919, %v2983
      %v2985 = vpop.f32.mrf.mxu0
      %2986 = vmatprep.mubr.bf16.mxu0 0
      %2987 = vmatmul.mubr.bf16.gmra.mxu0 %v2387
      %v2988 = vpop.f32.mrf.mxu0
      %v2989 = vadd.f32 %v2924, %v2988
      %v2990 = vpop.f32.mrf.mxu0
      %v2991 = vpop.f32.mrf.mxu0
      %v2992 = vadd.f32 %v2927, %v2991
      %v2993 = vpop.f32.mrf.mxu0
      %2994 = vmatprep.mubr.bf16.mxu0 0
      %2995 = vmatmul.mubr.bf16.gmra.mxu0 %v2725
      %v2996 = vpop.f32.mrf.mxu0
      %v2997 = vadd.f32 %v2932, %v2996
      %v2998 = vpop.f32.mrf.mxu0
      %v2999 = vpop.f32.mrf.mxu0
      %v3000 = vadd.f32 %v2935, %v2999
      %v3001 = vpop.f32.mrf.mxu0
      %3002 = vdwg.mxu0
      %v3003 = vadd.f32 %v2644, %v2973
      %v3004 = vadd.f32 %v2647, %v2976
      %v3005 = vadd.f32 %v2652, %v2981
      %v3006 = vadd.f32 %v2655, %v2984
      %v3007 = vadd.f32 %v2660, %v2989
      %v3008 = vadd.f32 %v2663, %v2992
      %v3009 = vadd.f32 %v2668, %v2997
      %v3010 = vadd.f32 %v2671, %v3000
      %v3011 = vld [vmem:[%s5] sm:$0x1]
      %v3013 = vlaneseq
      %v3014 = vshrl.u32 %v3013, 7
      %v3015 = vsub.s32 0, %v3014
      %v3016 = vrot.slane %v3011, %v3015
      %v3018 = vmul.f32 %v3003, %v3016
      %v3019 = vmul.f32 %v3004, %v3016
      %v3020 = vmul.f32 %v3005, %v3016
      %v3021 = vmul.f32 %v3006, %v3016
      %v3022 = vmul.f32 %v3007, %v3016
      %v3023 = vmul.f32 %v3008, %v3016
      %v3024 = vmul.f32 %v3009, %v3016
      %v3025 = vmul.f32 %v3010, %v3016
      %v3026 = vld [vmem:[%s6] sm:$0x1]
      %v3028 = vlaneseq
      %v3029 = vshrl.u32 %v3028, 7
      %v3030 = vsub.s32 0, %v3029
      %v3031 = vrot.slane %v3026, %v3030
      %v3033 = vadd.f32 %v3018, %v3031
      %v3034 = vadd.f32 %v3019, %v3031
      %v3035 = vadd.f32 %v3020, %v3031
      %v3036 = vadd.f32 %v3021, %v3031
      %v3037 = vadd.f32 %v3022, %v3031
      %v3038 = vadd.f32 %v3023, %v3031
      %v3039 = vadd.f32 %v3024, %v3031
      %v3040 = vadd.f32 %v3025, %v3031
      %v3041 = vld [vmem:[%s7] sm:$0xf]
      %v3042 = vld [vmem:[%s7 + $0x4] sm:$0xf]
      %v3043 = vld [vmem:[%s7 + $0x8] sm:$0xf]
      %v3044 = vld [vmem:[%s7 + $0xc] sm:$0xf]
      %v3045 = vld [vmem:[%s7 + $0x10] sm:$0xf]
      %v3046 = vld [vmem:[%s7 + $0x14] sm:$0xf]
      %v3047 = vld [vmem:[%s7 + $0x18] sm:$0xf]
      %v3048 = vld [vmem:[%s7 + $0x1c] sm:$0xf]
      %v3049 = vld [vmem:[%s7 + $0x20] sm:$0xf]
      %v3050 = vld [vmem:[%s7 + $0x24] sm:$0xf]
      %v3051 = vld [vmem:[%s7 + $0x28] sm:$0xf]
      %v3052 = vld [vmem:[%s7 + $0x2c] sm:$0xf]
      %v3053 = vld [vmem:[%s7 + $0x30] sm:$0xf]
      %v3054 = vld [vmem:[%s7 + $0x34] sm:$0xf]
      %v3055 = vld [vmem:[%s7 + $0x38] sm:$0xf]
      %v3056 = vld [vmem:[%s7 + $0x3c] sm:$0xf]
      %v3073 = vunpack.c.l.b16 %v3041
      %v3074 = vunpack.c.l.b16 %v3042
      %v3075 = vunpack.c.l.b16 %v3043
      %v3076 = vunpack.c.l.b16 %v3044
      %v3077 = vunpack.c.l.b16 %v3045
      %v3078 = vunpack.c.l.b16 %v3046
      %v3079 = vunpack.c.l.b16 %v3047
      %v3080 = vunpack.c.l.b16 %v3048
      %v3081 = vunpack.c.l.b16 %v3049
      %v3082 = vunpack.c.l.b16 %v3050
      %v3083 = vunpack.c.l.b16 %v3051
      %v3084 = vunpack.c.l.b16 %v3052
      %v3085 = vunpack.c.l.b16 %v3053
      %v3086 = vunpack.c.l.b16 %v3054
      %v3087 = vunpack.c.l.b16 %v3055
      %v3088 = vunpack.c.l.b16 %v3056
      %v3089 = vpack.c.b16 %v3074, %v3073
      %v3090 = vpack.c.b16 %v3076, %v3075
      %v3091 = vpack.c.b16 %v3078, %v3077
      %v3092 = vpack.c.b16 %v3080, %v3079
      %v3093 = vpack.c.b16 %v3082, %v3081
      %v3094 = vpack.c.b16 %v3084, %v3083
      %v3095 = vpack.c.b16 %v3086, %v3085
      %v3096 = vpack.c.b16 %v3088, %v3087
      %3105 = vmatprep.subr.bf16.mxu0 0
      %3106 = vmatpush1.bf16.msra.mxu0 %v3096
      %3107 = vmatprep.subr.bf16.mxu0 0
      %3108 = vmatpush1.bf16.msra.mxu0 %v3095
      %3109 = vmatprep.subr.bf16.mxu0 0
      %3110 = vmatpush1.bf16.msra.mxu0 %v3094
      %3111 = vmatprep.subr.bf16.mxu0 0
      %3112 = vmatpush1.bf16.msra.mxu0 %v3093
      %3113 = vmatprep.subr.bf16.mxu0 0
      %3114 = vmatpush1.bf16.msra.mxu0 %v3092
      %3115 = vmatprep.subr.bf16.mxu0 0
      %3116 = vmatpush1.bf16.msra.mxu0 %v3091
      %3117 = vmatprep.subr.bf16.mxu0 0
      %3118 = vmatpush1.bf16.msra.mxu0 %v3090
      %3119 = vmatprep.subr.bf16.mxu0 0
      %3120 = vmatpush1.bf16.msra.mxu0 %v3089
      %3121 = vmatprep.subr.bf16.mxu0 0
      %3122 = vmatpush2.bf16.msra.mxu0 0
      %3123 = vmatprep.subr.bf16.mxu0 0
      %3124 = vmatpush2.bf16.msra.mxu0 0
      %3125 = vmatprep.subr.bf16.mxu0 0
      %3126 = vmatpush2.bf16.msra.mxu0 0
      %3127 = vmatprep.subr.bf16.mxu0 0
      %3128 = vmatpush2.bf16.msra.mxu0 0
      %3129 = vmatprep.subr.bf16.mxu0 0
      %3130 = vmatpush2.bf16.msra.mxu0 0
      %3131 = vmatprep.subr.bf16.mxu0 0
      %3132 = vmatpush2.bf16.msra.mxu0 0
      %3133 = vmatprep.subr.bf16.mxu0 0
      %3134 = vmatpush2.bf16.msra.mxu0 0
      %3135 = vmatprep.subr.bf16.mxu0 0
      %3136 = vmatpush2.bf16.msra.mxu0 0
      %3137 = vmatprep.mubr.bf16.mxu0 0
      %3138 = vmatmul.mubr.bf16.gmra.mxu0 %v750
      %v3139 = vpop.f32.mrf.mxu0
      %v3140 = vadd.f32 0.0, %v3139
      %v3141 = vpop.f32.mrf.mxu0
      %v3142 = vpop.f32.mrf.mxu0
      %v3143 = vadd.f32 0.0, %v3142
      %v3144 = vpop.f32.mrf.mxu0
      %3145 = vmatprep.mubr.bf16.mxu0 0
      %3146 = vmatmul.mubr.bf16.gmra.mxu0 %v753
      %v3147 = vpop.f32.mrf.mxu0
      %v3148 = vadd.f32 0.0, %v3147
      %v3149 = vpop.f32.mrf.mxu0
      %v3150 = vpop.f32.mrf.mxu0
      %v3151 = vadd.f32 0.0, %v3150
      %v3152 = vpop.f32.mrf.mxu0
      %3153 = vmatprep.mubr.bf16.mxu0 0
      %3154 = vmatmul.mubr.bf16.gmra.mxu0 %v756
      %v3155 = vpop.f32.mrf.mxu0
      %v3156 = vadd.f32 0.0, %v3155
      %v3157 = vpop.f32.mrf.mxu0
      %v3158 = vpop.f32.mrf.mxu0
      %v3159 = vadd.f32 0.0, %v3158
      %v3160 = vpop.f32.mrf.mxu0
      %3161 = vmatprep.mubr.bf16.mxu0 0
      %3162 = vmatmul.mubr.bf16.gmra.mxu0 %v759
      %v3163 = vpop.f32.mrf.mxu0
      %v3164 = vadd.f32 0.0, %v3163
      %v3165 = vpop.f32.mrf.mxu0
      %v3166 = vpop.f32.mrf.mxu0
      %v3167 = vadd.f32 0.0, %v3166
      %v3168 = vpop.f32.mrf.mxu0
      %3169 = vdwg.mxu0
      %v3170 = vld [vmem:[%s8] sm:$0x1]
      %v3172 = vlaneseq
      %v3173 = vshrl.u32 %v3172, 7
      %v3174 = vsub.s32 0, %v3173
      %v3175 = vrot.slane %v3170, %v3174
      %v3177 = vmul.f32 %v3140, %v3175
      %v3178 = vmul.f32 %v3143, %v3175
      %v3179 = vmul.f32 %v3148, %v3175
      %v3180 = vmul.f32 %v3151, %v3175
      %v3181 = vmul.f32 %v3156, %v3175
      %v3182 = vmul.f32 %v3159, %v3175
      %v3183 = vmul.f32 %v3164, %v3175
      %v3184 = vmul.f32 %v3167, %v3175
      %v3185 = vld [vmem:[%s9] sm:$0x1]
      %v3187 = vlaneseq
      %v3188 = vshrl.u32 %v3187, 7
      %v3189 = vsub.s32 0, %v3188
      %v3190 = vrot.slane %v3185, %v3189
      %v3192 = vadd.f32 %v3177, %v3190
      %v3193 = vadd.f32 %v3178, %v3190
      %v3194 = vadd.f32 %v3179, %v3190
      %v3195 = vadd.f32 %v3180, %v3190
      %v3196 = vadd.f32 %v3181, %v3190
      %v3197 = vadd.f32 %v3182, %v3190
      %v3198 = vadd.f32 %v3183, %v3190
      %v3199 = vadd.f32 %v3184, %v3190
      %v3200 = vadd.f32 %v3033, %v3192
      %v3201 = vadd.f32 %v3034, %v3193
      %v3202 = vadd.f32 %v3035, %v3194
      %v3203 = vadd.f32 %v3036, %v3195
      %v3204 = vadd.f32 %v3037, %v3196
      %v3205 = vadd.f32 %v3038, %v3197
      %v3206 = vadd.f32 %v3039, %v3198
      %v3207 = vadd.f32 %v3040, %v3199
      %v3208 = vmax.f32 %v3200, 0.0
      %v3209 = vmax.f32 %v3201, 0.0
      %v3210 = vmax.f32 %v3202, 0.0
      %v3211 = vmax.f32 %v3203, 0.0
      %v3212 = vmax.f32 %v3204, 0.0
      %v3213 = vmax.f32 %v3205, 0.0
      %v3214 = vmax.f32 %v3206, 0.0
      %v3215 = vmax.f32 %v3207, 0.0
      %3216 = vst [vmem:[%s359] sm:$0xff] %v3208
      %3217 = vst [vmem:[%s359 + $0x8] sm:$0xff] %v3209
      %3218 = vst [vmem:[%s359 + $0x10] sm:$0xff] %v3210
      %3219 = vst [vmem:[%s359 + $0x18] sm:$0xff] %v3211
      %3220 = vst [vmem:[%s359 + $0x20] sm:$0xff] %v3212
      %3221 = vst [vmem:[%s359 + $0x28] sm:$0xff] %v3213
      %3222 = vst [vmem:[%s359 + $0x30] sm:$0xff] %v3214
      %3223 = vst [vmem:[%s359 + $0x38] sm:$0xff] %v3215
      %p3224 = scmp.lt.s32.totalorder %s21, 1
      %s3225 = scalar_select %p3224, %s21, 1
      %s3226 = smul.addr %s3225, 8
      %s3227 = smul.addr %s3226, 8
      %s3228 = scalar_lea.vmem %s10, %s3227
      // Predicated region
      $region61: #{basic_block_forward.1} parent=59 // pred_check
        %p3229 = pneg %p254
      $region62: #{basic_block_forward.1} parent=59 // pred_check_branch
        %3231 = sbr.rel (%p3229) target = $region64
      $region63: #{basic_block_forward.1} parent=59 // pred_region
        _
      $region64: #{basic_block_forward.1} parent=59 // pred_fallthru
        _
    $region60: #{basic_block_forward.1} parent=5 // pred_fallthru
      _
    %p3232 = scmp.le.s32.totalorder 2, %s16
    // Predicated region
    $region65: #{basic_block_forward.1} parent=5 // pred_check
      %p3233 = pneg %p3232
    $region66: #{basic_block_forward.1} parent=5 // pred_check_branch
      %3235 = sbr.rel (%p3233) target = $region68
    $region67: #{basic_block_forward.1} parent=5 // pred_region
      %s3236 = ssub.s32 %s16, 2
      // Predicated region
      $region69: #{basic_block_forward.1} parent=67 // pred_check
        %p3237 = pneg %p260
      $region70: #{basic_block_forward.1} parent=67 // pred_check_branch
        %3239 = sbr.rel (%p3237) target = $region72
      $region71: #{basic_block_forward.1} parent=67 // pred_region
        %p3240 = scmp.lt.s32.totalorder %s22, 1
        %s3241 = scalar_select %p3240, %s22, 1
        %s3242 = smul.addr %s3241, 8
        %s3243 = smul.addr %s3242, 8
        %s3244 = scalar_lea.vmem %s10, %s3243
      $region72: #{basic_block_forward.1} parent=67 // pred_fallthru
        _
    $region68: #{basic_block_forward.1} parent=5 // pred_fallthru
      _
  $region6: #{basic_block_forward.1} parent=0 // loop_footer
    %s20 = sadd.s32 1, %s16
  $region7: #{basic_block_forward.1} parent=0 // loop_footer_branch
    %15 = sbr.rel target = $region3
  $region8: #{basic_block_forward.1} parent=0 // loop_exit
    _

</llo_original>
